<compile_context>
chip_gen: v7x
topology: tpu7x:2x2x1
jax: 0.10.0
libtpu: 0.0.40
codegen_flags: <defaults>
</compile_context>

<pallas_src>
import functools
import numpy as np
import jax
import jax.numpy as jnp
from jax.experimental import pallas as pl
from jax.experimental.pallas import tpu as pltpu


def _round_up(x, m):
    return (x + m - 1) // m * m


# ------------------- fused kernel: pool + pair + outblock MLP + head -------------------
def _fused_pair_kernel(rx1_ref, rx2_ref, wxyz_ref, selj_ref, seli_ref,
                       w1l_ref, w1r_ref, b1_ref, w2_ref, b2_ref,
                       wh_ref, bh_ref, o_ref, *, A, P, APAD):
    """One grid step = one point-cloud pair.

    rx*_ref : (1, A*P, 8)  per-anchor-rotated centered xyz (+ constant-1 bias col, 0-pad)
    wxyz_ref: (8, C)       xyz embed weight rows 0-2, effective bias row 3, zero rows 4-7
    sel*_ref: (A*A, APAD)  one-hot pair selectors (bf16)
    w1l/w1r : (C, H1)      first outblock-MLP weight split into f1 / f2 halves (bf16)
    w2, wh  : (H1,H2), (H2,HW) remaining MLP + packed attention/quaternion head (bf16)
    o_ref   : (1, A*A, HW) lane-dense packed head output
    """
    C = wxyz_ref.shape[1]
    wxyz = wxyz_ref[...]                                               # f32

    def pool(rx):                                                      # rx: [A*P, 8] f32
        h = jnp.dot(rx, wxyz, preferred_element_type=jnp.float32)      # [A*P, C] (bias incl.)
        h = jnp.max(h.reshape(A, P, C), axis=1)                        # max over points
        h = jnp.maximum(h, 0.0)                                        # ReLU from _pooling
        if APAD > A:                                                   # pad anchors to 8-mult
            h = jnp.concatenate([h, jnp.zeros((APAD - A, C), h.dtype)], axis=0)
        return h                                                       # [APAD, C]

    f1 = pool(rx1_ref[0])
    f2 = pool(rx2_ref[0])

    # pairs[i*A+j] = concat(f1[j], f2[i]); fused into layer-1 via selector matmuls.
    g1 = jnp.dot(f1.astype(jnp.bfloat16), w1l_ref[...],
                 preferred_element_type=jnp.float32)                   # [APAD, H1]
    g2 = jnp.dot(f2.astype(jnp.bfloat16), w1r_ref[...],
                 preferred_element_type=jnp.float32)
    h = (jnp.dot(selj_ref[...], g1.astype(jnp.bfloat16),
                 preferred_element_type=jnp.float32)
         + jnp.dot(seli_ref[...], g2.astype(jnp.bfloat16),
                   preferred_element_type=jnp.float32)
         + b1_ref[...])
    h = jnp.maximum(h, 0.0)                                            # [A*A, H1]

    h = jnp.dot(h.astype(jnp.bfloat16), w2_ref[...],
                preferred_element_type=jnp.float32) + b2_ref[...]
    h = jnp.maximum(h, 0.0)                                            # [A*A, H2]

    out = jnp.dot(h.astype(jnp.bfloat16), wh_ref[...],
                  preferred_element_type=jnp.float32) + bh_ref[...]    # [A*A, HW]
    o_ref[0] = out.astype(o_ref.dtype)                                 # lane-dense store


def fused_pair_pallas(rx1, rx2, wxyz8, selj, seli, w1l, w1r, b1, w2, b2, wh, bh,
                      *, A, P, APAD):
    nb = rx1.shape[0]
    C = wxyz8.shape[1]
    H1 = w1l.shape[1]
    H2 = w2.shape[1]
    HW = wh.shape[1]
    AA = A * A

    # TODO(synk): for very large P (>> VMEM, esp. v7x 64 MiB) add an "arbitrary" P-tiling
    # grid axis with a running-max accumulator in VMEM scratch; whole-cloud blocks are
    # fine at these demo shapes.
    flops_per_pair = (2 * 2 * (A * P) * 8 * C          # two embed matmuls
                      + 2 * 2 * APAD * C * H1          # g1/g2
                      + 2 * 2 * AA * APAD * H1         # selector matmuls
                      + 2 * AA * H1 * H2               # MLP layer 2
                      + 2 * AA * H2 * HW)              # packed head
    bytes_per_pair = 2 * (A * P * 8 * 4) + AA * HW * 4
    weight_bytes = (wxyz8.size * 4 + (selj.size + seli.size) * 2
                    + (w1l.size + w1r.size + w2.size + wh.size) * 2
                    + (b1.size + b2.size + bh.size) * 4)

    return pl.pallas_call(
        functools.partial(_fused_pair_kernel, A=A, P=P, APAD=APAD),
        out_shape=jax.ShapeDtypeStruct((nb, AA, HW), jnp.float32),
        grid_spec=pltpu.PrefetchScalarGridSpec(
            num_scalar_prefetch=0,
            grid=(nb,),
            in_specs=[
                pl.BlockSpec((1, A * P, 8), lambda b: (b, 0, 0)),
                pl.BlockSpec((1, A * P, 8), lambda b: (b, 0, 0)),
                pl.BlockSpec((8, C), lambda b: (0, 0)),
                pl.BlockSpec((AA, APAD), lambda b: (0, 0)),
                pl.BlockSpec((AA, APAD), lambda b: (0, 0)),
                pl.BlockSpec((C, H1), lambda b: (0, 0)),
                pl.BlockSpec((C, H1), lambda b: (0, 0)),
                pl.BlockSpec((1, H1), lambda b: (0, 0)),
                pl.BlockSpec((H1, H2), lambda b: (0, 0)),
                pl.BlockSpec((1, H2), lambda b: (0, 0)),
                pl.BlockSpec((H2, HW), lambda b: (0, 0)),
                pl.BlockSpec((1, HW), lambda b: (0, 0)),
            ],
            out_specs=pl.BlockSpec((1, AA, HW), lambda b: (b, 0, 0)),
        ),
        compiler_params=pltpu.CompilerParams(
            dimension_semantics=("parallel",),       # pairs across TCs on v7x
            vmem_limit_bytes=32 * 1024 * 1024,
        ),
        cost_estimate=pl.CostEstimate(
            flops=nb * flops_per_pair,
            transcendentals=0,
            bytes_accessed=nb * bytes_per_pair + weight_bytes,
        ),
    )(rx1, rx2, wxyz8, selj, seli, w1l, w1r, b1, w2, b2, wh, bh)


# ------------------------------- parameter setup -----------------------------------
def make_anchors(na):
    # TODO(synk): real anchors come from the icosahedral rotation group (vgtk get_anchors);
    # deterministic z-axis rotations are used for this synthetic model.
    angles = 2.0 * np.pi * np.arange(na) / na
    c, s = np.cos(angles), np.sin(angles)
    R = np.zeros((na, 3, 3), np.float32)
    R[:, 0, 0] = c
    R[:, 0, 1] = -s
    R[:, 1, 0] = s
    R[:, 1, 1] = c
    R[:, 2, 2] = 1.0
    return jnp.asarray(R)


def _init_linear(key, c_in, c_out):
    kw, kb = jax.random.split(key)
    scale = 1.0 / np.sqrt(c_in)
    w = jax.random.uniform(kw, (c_in, c_out), jnp.float32, -scale, scale)
    b = jax.random.uniform(kb, (c_out,), jnp.float32, -scale, scale)
    return w, b


def init_params(key, na=4, backbone_dims=((1, 16, 32), (32, 32, 64)),
                ob_mlp=(64, 64), temperature=3.0, head_width=128):
    params = {"na": na, "anchors": make_anchors(na)}
    keys = iter(jax.random.split(key, 16))

    backbone = []
    for dims in backbone_dims:
        block = [_init_linear(next(keys), ci, co)
                 for ci, co in zip(dims[:-1], dims[1:])]
        backbone.append(block)
    params["backbone"] = backbone

    dim_in = backbone_dims[-1][-1]
    ob = {"temperature": temperature}
    ob["pointnet"] = _init_linear(next(keys), dim_in + 3, dim_in)
    mlp = []
    c_in = dim_in * 2
    for c in ob_mlp:
        mlp.append(_init_linear(next(keys), c_in, c))
        c_in = c
    ob["mlp"] = mlp
    aw, ab = _init_linear(next(keys), ob_mlp[-1], 1)     # attention head
    qw, qb = _init_linear(next(keys), ob_mlp[-1], 4)     # quaternion regressor
    ob["attention"] = (aw, ab)
    ob["regressor"] = (qw, qb)
    # Lane-dense fused head: col 0 = attention logit, cols 1:5 = quaternion, rest zero.
    head_w = jnp.zeros((ob_mlp[-1], head_width), jnp.float32)
    head_w = head_w.at[:, 0:1].set(aw).at[:, 1:5].set(qw)
    head_b = jnp.zeros((head_width,), jnp.float32)
    head_b = head_b.at[0:1].set(ab).at[1:5].set(qb)
    ob["head"] = (head_w, head_b)
    params["outblock"] = ob
    return params


# ----------------------------------- forward ---------------------------------------
def reg_so3_forward(params, x):
    # x: [nb, 2, np, 3]  (a pair of point clouds per example)
    nb, _, P, _ = x.shape
    A = int(params["na"])
    anchors = params["anchors"]                              # [A, 3, 3]
    ob = params["outblock"]

    # --- constant backbone: preprocess_input(x, na, False) gives all-ones occupancy
    # feats, and the BasicSO3ConvBlock hot path modeled here is a pointwise channel MLP,
    # so its output is ONE constant row.  Evaluate it in plain JAX (constant-folded).
    # TODO(synk): the real intra/inter SO3 kernel correlation, ball-query grouping,
    # strided subsampling and batch norm of BasicSO3ConvBlock are not reproduced; if a
    # non-constant feats path is needed, fuse the 1x1-conv chain into the kernel instead.
    feat = jnp.ones((1, 1), jnp.float32)
    for (w, b) in [lw for blk in params["backbone"] for lw in blk]:
        feat = jnp.maximum(feat @ w + b[None, :], 0.0)       # [1, C]
    C = feat.shape[-1]

    # --- PointnetSO3Conv embed weight: fold the constant-feats contribution into the
    # bias, and pack xyz-weight + effective bias into one K=8, MXU-aligned matrix.
    w_pn, b_pn = ob["pointnet"]                              # [C+3, C], [C]
    b_eff = b_pn[None, :] + feat @ w_pn[:C]                  # [1, C]
    wxyz8 = jnp.concatenate(
        [w_pn[C:], b_eff, jnp.zeros((4, C), jnp.float32)], axis=0)   # [8, C]

    # --- per-cloud centered xyz, pre-rotated per anchor (rotation folded out of kernel).
    # TODO(synk): rotated-xyz convention assumed as xyz @ R^T per anchor (matches the
    # previous rw = anchors^T @ w_xyz fold); verify against PointnetSO3Conv if needed.
    def prep(xc):                                            # xc: [nb, P, 3]
        xc = xc - jnp.mean(xc, axis=1, keepdims=True)        # PointnetSO3Conv centering
        rx = jnp.einsum("bpj,aij->bapi", xc, anchors)        # [nb, A, P, 3]
        rx = rx.reshape(nb, A * P, 3)
        ones = jnp.ones((nb, A * P, 1), jnp.float32)         # bias column
        zpad = jnp.zeros((nb, A * P, 4), jnp.float32)        # pad K to 8
        return jnp.concatenate([rx, ones, zpad], axis=-1)    # [nb, A*P, 8]

    rx1 = prep(x[:, 0])                                      # cloud 1 of each pair -> f1
    rx2 = prep(x[:, 1])                                      # cloud 2 of each pair -> f2

    # --- one-hot selectors that build pair rows r = i*A + j as [f1[j], f2[i]] on the MXU.
    APAD = max(8, _round_up(A, 8))
    r = jnp.arange(A * A)
    cols = jnp.arange(APAD)
    selj = (r[:, None] % A == cols[None, :]).astype(jnp.bfloat16)    # [A*A, APAD]
    seli = (r[:, None] // A == cols[None, :]).astype(jnp.bfloat16)

    # --- outblock weights, pre-cast once to bf16 (weights are constants).
    (w1, b1), (w2, b2) = ob["mlp"]
    wh, bh = ob["head"]
    HW = wh.shape[1]
    w1l = w1[:C].astype(jnp.bfloat16)                        # f1 half of layer-1 weight
    w1r = w1[C:].astype(jnp.bfloat16)                        # f2 half
    w2b = w2.astype(jnp.bfloat16)
    whb = wh.astype(jnp.bfloat16)
    b1r = b1.reshape(1, -1)
    b2r = b2.reshape(1, -1)
    bhr = bh.reshape(1, -1)

    out = fused_pair_pallas(rx1, rx2, wxyz8, selj, seli, w1l, w1r, b1r,
                            w2b, b2r, whb, bhr, A=A, P=P, APAD=APAD)  # [nb, A*A, HW]
    out = out.reshape(nb, A, A, HW)

    att = out[..., 0]                                        # [nb, A, A]
    confidence = jax.nn.softmax(att * ob["temperature"], axis=1)  # softmax over tgt anchors
    quats = jnp.transpose(out[..., 1:5], (0, 3, 1, 2))       # [nb, 4, A, A] (NCHW)
    return confidence, quats


if __name__ == "__main__":
    key = jax.random.PRNGKey(0)
    kparam, kx = jax.random.split(key)

    NA = 4          # kanchor (na)
    NB = 2          # batch (pairs)
    NP = 64         # points per cloud

    params = init_params(kparam, na=NA)
    x = jax.random.normal(kx, (NB, 2, NP, 3), jnp.float32)

    confidence, quats = jax.jit(lambda inp: reg_so3_forward(params, inp))(x)
    jax.block_until_ready((confidence, quats))

    assert confidence.shape == (NB, NA, NA)
    assert quats.shape == (NB, 4, NA, NA)
    assert bool(jnp.all(jnp.isfinite(confidence))) and bool(jnp.all(jnp.isfinite(quats)))
    print("KERNEL_OK")
</pallas_src>

<mosaic_0001>
module attributes {stable_mosaic.version = 11 : i64} {
  func.func @_fused_pair_kernel(%arg0: i32, %arg1: memref<1x256x8xf32, #tpu.memory_space<vmem>>, %arg2: memref<1x256x8xf32, #tpu.memory_space<vmem>>, %arg3: memref<8x64xf32, #tpu.memory_space<vmem>>, %arg4: memref<16x8xbf16, #tpu.memory_space<vmem>>, %arg5: memref<16x8xbf16, #tpu.memory_space<vmem>>, %arg6: memref<64x64xbf16, #tpu.memory_space<vmem>>, %arg7: memref<64x64xbf16, #tpu.memory_space<vmem>>, %arg8: memref<1x64xf32, #tpu.memory_space<vmem>>, %arg9: memref<64x64xbf16, #tpu.memory_space<vmem>>, %arg10: memref<1x64xf32, #tpu.memory_space<vmem>>, %arg11: memref<64x128xbf16, #tpu.memory_space<vmem>>, %arg12: memref<1x128xf32, #tpu.memory_space<vmem>>, %arg13: memref<1x16x128xf32, #tpu.memory_space<vmem>>) attributes {dimension_semantics = [#tpu.dimension_semantics<parallel>], iteration_bounds = array<i64: 2>, scalar_prefetch = 0 : i64, scratch_operands = 0 : i64, tpu.core_type = #tpu.core_type<tc>, window_params = [{transform_indices = @transform_0, window_bounds = array<i64: 1, 256, 8>}, {transform_indices = @transform_1, window_bounds = array<i64: 1, 256, 8>}, {pipeline_mode = #tpu.pipeline_mode<synchronous>, transform_indices = @transform_2, window_bounds = array<i64: 8, 64>}, {pipeline_mode = #tpu.pipeline_mode<synchronous>, transform_indices = @transform_3, window_bounds = array<i64: 16, 8>}, {pipeline_mode = #tpu.pipeline_mode<synchronous>, transform_indices = @transform_4, window_bounds = array<i64: 16, 8>}, {pipeline_mode = #tpu.pipeline_mode<synchronous>, transform_indices = @transform_5, window_bounds = array<i64: 64, 64>}, {pipeline_mode = #tpu.pipeline_mode<synchronous>, transform_indices = @transform_6, window_bounds = array<i64: 64, 64>}, {pipeline_mode = #tpu.pipeline_mode<synchronous>, transform_indices = @transform_7, window_bounds = array<i64: 1, 64>}, {pipeline_mode = #tpu.pipeline_mode<synchronous>, transform_indices = @transform_8, window_bounds = array<i64: 64, 64>}, {pipeline_mode = #tpu.pipeline_mode<synchronous>, transform_indices = @transform_9, window_bounds = array<i64: 1, 64>}, {pipeline_mode = #tpu.pipeline_mode<synchronous>, transform_indices = @transform_10, window_bounds = array<i64: 64, 128>}, {pipeline_mode = #tpu.pipeline_mode<synchronous>, transform_indices = @transform_11, window_bounds = array<i64: 1, 128>}, {transform_indices = @transform_12, window_bounds = array<i64: 1, 16, 128>}]} {
    %c0 = arith.constant 0 : index
    %c0_0 = arith.constant 0 : index
    %0 = vector.load %arg3[%c0, %c0_0] : memref<8x64xf32, #tpu.memory_space<vmem>>, vector<8x64xf32>
    %c0_1 = arith.constant 0 : index
    %c0_2 = arith.constant 0 : index
    %c0_3 = arith.constant 0 : index
    %1 = vector.load %arg1[%c0_1, %c0_2, %c0_3] : memref<1x256x8xf32, #tpu.memory_space<vmem>>, vector<1x256x8xf32>
    %2 = vector.shape_cast %1 : vector<1x256x8xf32> to vector<256x8xf32>
    %cst = arith.constant dense<0.000000e+00> : vector<256x64xf32>
    %3 = tpu.matmul %2, %0, %cst {dimension_numbers = #tpu.dot_dimension_numbers<[1], [0], [0], [1], [0, 0, 1, 1], [], []>} : vector<256x8xf32>, vector<8x64xf32>, vector<256x64xf32> -> vector<256x64xf32>
    %4 = vector.shape_cast %3 : vector<256x64xf32> to vector<4x64x64xf32>
    %cst_4 = arith.constant dense<0xFF800000> : vector<4x64xf32>
    %5 = vector.multi_reduction <maximumf>, %4, %cst_4 [1] : vector<4x64x64xf32> to vector<4x64xf32>
    %cst_5 = arith.constant 0.000000e+00 : f32
    %6 = vector.broadcast %cst_5 : f32 to vector<4x64xf32>
    %7 = arith.maximumf %5, %6 : vector<4x64xf32>
    %cst_6 = arith.constant 0.000000e+00 : f32
    %8 = vector.broadcast %cst_6 : f32 to vector<4x64xf32>
    %9 = tpu.concatenate %7, %8 in 0 : vector<4x64xf32>, vector<4x64xf32> -> vector<8x64xf32>
    %c0_7 = arith.constant 0 : index
    %c0_8 = arith.constant 0 : index
    %c0_9 = arith.constant 0 : index
    %10 = vector.load %arg2[%c0_7, %c0_8, %c0_9] : memref<1x256x8xf32, #tpu.memory_space<vmem>>, vector<1x256x8xf32>
    %11 = vector.shape_cast %10 : vector<1x256x8xf32> to vector<256x8xf32>
    %cst_10 = arith.constant dense<0.000000e+00> : vector<256x64xf32>
    %12 = tpu.matmul %11, %0, %cst_10 {dimension_numbers = #tpu.dot_dimension_numbers<[1], [0], [0], [1], [0, 0, 1, 1], [], []>} : vector<256x8xf32>, vector<8x64xf32>, vector<256x64xf32> -> vector<256x64xf32>
    %13 = vector.shape_cast %12 : vector<256x64xf32> to vector<4x64x64xf32>
    %cst_11 = arith.constant dense<0xFF800000> : vector<4x64xf32>
    %14 = vector.multi_reduction <maximumf>, %13, %cst_11 [1] : vector<4x64x64xf32> to vector<4x64xf32>
    %cst_12 = arith.constant 0.000000e+00 : f32
    %15 = vector.broadcast %cst_12 : f32 to vector<4x64xf32>
    %16 = arith.maximumf %14, %15 : vector<4x64xf32>
    %cst_13 = arith.constant 0.000000e+00 : f32
    %17 = vector.broadcast %cst_13 : f32 to vector<4x64xf32>
    %18 = tpu.concatenate %16, %17 in 0 : vector<4x64xf32>, vector<4x64xf32> -> vector<8x64xf32>
    %19 = arith.truncf %9 : vector<8x64xf32> to vector<8x64xbf16>
    %c0_14 = arith.constant 0 : index
    %c0_15 = arith.constant 0 : index
    %20 = vector.load %arg6[%c0_14, %c0_15] : memref<64x64xbf16, #tpu.memory_space<vmem>>, vector<64x64xbf16>
    %cst_16 = arith.constant dense<0.000000e+00> : vector<8x64xf32>
    %21 = tpu.matmul %19, %20, %cst_16 {dimension_numbers = #tpu.dot_dimension_numbers<[1], [0], [0], [1], [0, 0, 1, 1], [], []>} : vector<8x64xbf16>, vector<64x64xbf16>, vector<8x64xf32> -> vector<8x64xf32>
    %22 = arith.truncf %18 : vector<8x64xf32> to vector<8x64xbf16>
    %c0_17 = arith.constant 0 : index
    %c0_18 = arith.constant 0 : index
    %23 = vector.load %arg7[%c0_17, %c0_18] : memref<64x64xbf16, #tpu.memory_space<vmem>>, vector<64x64xbf16>
    %cst_19 = arith.constant dense<0.000000e+00> : vector<8x64xf32>
    %24 = tpu.matmul %22, %23, %cst_19 {dimension_numbers = #tpu.dot_dimension_numbers<[1], [0], [0], [1], [0, 0, 1, 1], [], []>} : vector<8x64xbf16>, vector<64x64xbf16>, vector<8x64xf32> -> vector<8x64xf32>
    %c0_20 = arith.constant 0 : index
    %c0_21 = arith.constant 0 : index
    %25 = vector.load %arg4[%c0_20, %c0_21] : memref<16x8xbf16, #tpu.memory_space<vmem>>, vector<16x8xbf16>
    %26 = arith.truncf %21 : vector<8x64xf32> to vector<8x64xbf16>
    %cst_22 = arith.constant dense<0.000000e+00> : vector<16x64xf32>
    %27 = tpu.matmul %25, %26, %cst_22 {dimension_numbers = #tpu.dot_dimension_numbers<[1], [0], [0], [1], [0, 0, 1, 1], [], []>} : vector<16x8xbf16>, vector<8x64xbf16>, vector<16x64xf32> -> vector<16x64xf32>
    %c0_23 = arith.constant 0 : index
    %c0_24 = arith.constant 0 : index
    %28 = vector.load %arg5[%c0_23, %c0_24] : memref<16x8xbf16, #tpu.memory_space<vmem>>, vector<16x8xbf16>
    %29 = arith.truncf %24 : vector<8x64xf32> to vector<8x64xbf16>
    %cst_25 = arith.constant dense<0.000000e+00> : vector<16x64xf32>
    %30 = tpu.matmul %28, %29, %cst_25 {dimension_numbers = #tpu.dot_dimension_numbers<[1], [0], [0], [1], [0, 0, 1, 1], [], []>} : vector<16x8xbf16>, vector<8x64xbf16>, vector<16x64xf32> -> vector<16x64xf32>
    %31 = arith.addf %27, %30 : vector<16x64xf32>
    %c0_26 = arith.constant 0 : index
    %c0_27 = arith.constant 0 : index
    %32 = vector.load %arg8[%c0_26, %c0_27] : memref<1x64xf32, #tpu.memory_space<vmem>>, vector<1x64xf32>
    %33 = vector.broadcast %32 : vector<1x64xf32> to vector<16x64xf32>
    %34 = arith.addf %31, %33 : vector<16x64xf32>
    %cst_28 = arith.constant 0.000000e+00 : f32
    %35 = vector.broadcast %cst_28 : f32 to vector<16x64xf32>
    %36 = arith.maximumf %34, %35 : vector<16x64xf32>
    %37 = arith.truncf %36 : vector<16x64xf32> to vector<16x64xbf16>
    %c0_29 = arith.constant 0 : index
    %c0_30 = arith.constant 0 : index
    %38 = vector.load %arg9[%c0_29, %c0_30] : memref<64x64xbf16, #tpu.memory_space<vmem>>, vector<64x64xbf16>
    %cst_31 = arith.constant dense<0.000000e+00> : vector<16x64xf32>
    %39 = tpu.matmul %37, %38, %cst_31 {dimension_numbers = #tpu.dot_dimension_numbers<[1], [0], [0], [1], [0, 0, 1, 1], [], []>} : vector<16x64xbf16>, vector<64x64xbf16>, vector<16x64xf32> -> vector<16x64xf32>
    %c0_32 = arith.constant 0 : index
    %c0_33 = arith.constant 0 : index
    %40 = vector.load %arg10[%c0_32, %c0_33] : memref<1x64xf32, #tpu.memory_space<vmem>>, vector<1x64xf32>
    %41 = vector.broadcast %40 : vector<1x64xf32> to vector<16x64xf32>
    %42 = arith.addf %39, %41 : vector<16x64xf32>
    %cst_34 = arith.constant 0.000000e+00 : f32
    %43 = vector.broadcast %cst_34 : f32 to vector<16x64xf32>
    %44 = arith.maximumf %42, %43 : vector<16x64xf32>
    %45 = arith.truncf %44 : vector<16x64xf32> to vector<16x64xbf16>
    %c0_35 = arith.constant 0 : index
    %c0_36 = arith.constant 0 : index
    %46 = vector.load %arg11[%c0_35, %c0_36] : memref<64x128xbf16, #tpu.memory_space<vmem>>, vector<64x128xbf16>
    %cst_37 = arith.constant dense<0.000000e+00> : vector<16x128xf32>
    %47 = tpu.matmul %45, %46, %cst_37 {dimension_numbers = #tpu.dot_dimension_numbers<[1], [0], [0], [1], [0, 0, 1, 1], [], []>} : vector<16x64xbf16>, vector<64x128xbf16>, vector<16x128xf32> -> vector<16x128xf32>
    %c0_38 = arith.constant 0 : index
    %c0_39 = arith.constant 0 : index
    %48 = vector.load %arg12[%c0_38, %c0_39] : memref<1x128xf32, #tpu.memory_space<vmem>>, vector<1x128xf32>
    %49 = vector.broadcast %48 : vector<1x128xf32> to vector<16x128xf32>
    %50 = arith.addf %47, %49 : vector<16x128xf32>
    %c0_40 = arith.constant 0 : index
    %c0_41 = arith.constant 0 : index
    %c0_42 = arith.constant 0 : index
    %51 = vector.load %arg13[%c0_40, %c0_41, %c0_42] : memref<1x16x128xf32, #tpu.memory_space<vmem>>, vector<1x16x128xf32>
    %52 = vector.shape_cast %51 : vector<1x16x128xf32> to vector<16x128xf32>
    %53 = vector.shape_cast %50 : vector<16x128xf32> to vector<1x16x128xf32>
    tpu.vector_store %arg13[%c0_40, %c0_41, %c0_42], %53 {strides = array<i32>} : memref<1x16x128xf32, #tpu.memory_space<vmem>>, vector<1x16x128xf32>,
    return
  }
  func.func @transform_0(%arg0: i32) -> (i32, i32, i32) {
    %c0_i32 = arith.constant 0 : i32
    %c0_i32_0 = arith.constant 0 : i32
    %c0_i32_1 = arith.constant 0 : i32
    return %arg0, %c0_i32, %c0_i32_0 : i32, i32, i32
  }
  func.func @transform_1(%arg0: i32) -> (i32, i32, i32) {
    %c0_i32 = arith.constant 0 : i32
    %c0_i32_0 = arith.constant 0 : i32
    %c0_i32_1 = arith.constant 0 : i32
    return %arg0, %c0_i32, %c0_i32_0 : i32, i32, i32
  }
  func.func @transform_2(%arg0: i32) -> (i32, i32) {
    %c0_i32 = arith.constant 0 : i32
    %c0_i32_0 = arith.constant 0 : i32
    %c0_i32_1 = arith.constant 0 : i32
    return %c0_i32, %c0_i32_0 : i32, i32
  }
  func.func @transform_3(%arg0: i32) -> (i32, i32) {
    %c0_i32 = arith.constant 0 : i32
    %c0_i32_0 = arith.constant 0 : i32
    %c0_i32_1 = arith.constant 0 : i32
    return %c0_i32, %c0_i32_0 : i32, i32
  }
  func.func @transform_4(%arg0: i32) -> (i32, i32) {
    %c0_i32 = arith.constant 0 : i32
    %c0_i32_0 = arith.constant 0 : i32
    %c0_i32_1 = arith.constant 0 : i32
    return %c0_i32, %c0_i32_0 : i32, i32
  }
  func.func @transform_5(%arg0: i32) -> (i32, i32) {
    %c0_i32 = arith.constant 0 : i32
    %c0_i32_0 = arith.constant 0 : i32
    %c0_i32_1 = arith.constant 0 : i32
    return %c0_i32, %c0_i32_0 : i32, i32
  }
  func.func @transform_6(%arg0: i32) -> (i32, i32) {
    %c0_i32 = arith.constant 0 : i32
    %c0_i32_0 = arith.constant 0 : i32
    %c0_i32_1 = arith.constant 0 : i32
    return %c0_i32, %c0_i32_0 : i32, i32
  }
  func.func @transform_7(%arg0: i32) -> (i32, i32) {
    %c0_i32 = arith.constant 0 : i32
    %c0_i32_0 = arith.constant 0 : i32
    %c0_i32_1 = arith.constant 0 : i32
    return %c0_i32, %c0_i32_0 : i32, i32
  }
  func.func @transform_8(%arg0: i32) -> (i32, i32) {
    %c0_i32 = arith.constant 0 : i32
    %c0_i32_0 = arith.constant 0 : i32
    %c0_i32_1 = arith.constant 0 : i32
    return %c0_i32, %c0_i32_0 : i32, i32
  }
  func.func @transform_9(%arg0: i32) -> (i32, i32) {
    %c0_i32 = arith.constant 0 : i32
    %c0_i32_0 = arith.constant 0 : i32
    %c0_i32_1 = arith.constant 0 : i32
    return %c0_i32, %c0_i32_0 : i32, i32
  }
  func.func @transform_10(%arg0: i32) -> (i32, i32) {
    %c0_i32 = arith.constant 0 : i32
    %c0_i32_0 = arith.constant 0 : i32
    %c0_i32_1 = arith.constant 0 : i32
    return %c0_i32, %c0_i32_0 : i32, i32
  }
  func.func @transform_11(%arg0: i32) -> (i32, i32) {
    %c0_i32 = arith.constant 0 : i32
    %c0_i32_0 = arith.constant 0 : i32
    %c0_i32_1 = arith.constant 0 : i32
    return %c0_i32, %c0_i32_0 : i32, i32
  }
  func.func @transform_12(%arg0: i32) -> (i32, i32, i32) {
    %c0_i32 = arith.constant 0 : i32
    %c0_i32_0 = arith.constant 0 : i32
    %c0_i32_1 = arith.constant 0 : i32
    return %arg0, %c0_i32, %c0_i32_0 : i32, i32, i32
  }
}

</mosaic_0001>

<llo_original>
// kernel: _lambda_.1
$region0: #{_lambda_.1}
  #allocation0 [shape = 'u32[]', space=smem, size = 0x4, offset = 0x4, fixed_abs, tag = 'smem constant byte address 0x4 - core index']
  #allocation1 [shape = 'u32[144,128]{1,0:T(1,128)}', space=vmem, size = 0x12000, scoped, tag = 'internal scratch']
  %s0 = inlined_call_operand.vmem [shape: f32[2,256,8], index: 0, kind: input, shape index: {}]
  %s1 = inlined_call_operand.vmem [shape: f32[2,256,8], index: 1, kind: input, shape index: {}]
  %s2 = inlined_call_operand.vmem [shape: f32[8,64], index: 2, kind: input, shape index: {}]
  %s3 = inlined_call_operand.vmem [shape: bf16[16,8], index: 3, kind: input, shape index: {}]
  %s4 = inlined_call_operand.vmem [shape: bf16[16,8], index: 4, kind: input, shape index: {}]
  %s5 = inlined_call_operand.vmem [shape: bf16[64,64], index: 5, kind: input, shape index: {}]
  %s6 = inlined_call_operand.vmem [shape: bf16[64,64], index: 6, kind: input, shape index: {}]
  %s7 = inlined_call_operand.vmem [shape: f32[1,64], index: 7, kind: input, shape index: {}]
  %s8 = inlined_call_operand.vmem [shape: bf16[64,64], index: 8, kind: input, shape index: {}]
  %s9 = inlined_call_operand.vmem [shape: f32[1,64], index: 9, kind: input, shape index: {}]
  %s10 = inlined_call_operand.vmem [shape: bf16[64,128], index: 10, kind: input, shape index: {}]
  %s11 = inlined_call_operand.vmem [shape: f32[1,128], index: 11, kind: input, shape index: {}]
  %s12 = inlined_call_operand.vmem [shape: f32[2,16,128], index: 12, kind: output, shape index: {}]
  %s13 = sld [smem:[#allocation0]]
  $region81: #{_lambda_.1} parent=0
    _
  %s15 = ssub.s32 1, %s13
  %s16 = scalar_select 0, %s15, %s13
  loop: start=0, step=1, limit=4
  $region2: #{_lambda_.1} parent=0 // loop_pre_header
    _
  $region3: #{_lambda_.1} parent=0 // loop_header
    %s18 = sphi 0, %s22
    %p19 = scmp.ge.s32.totalorder %s18, 4
    %s28 = sphi 0, %s30
    %s31 = sphi 0, %s28
    %s32 = sphi 0, %s31
    %s48 = sphi 0, %s32
    %s54 = sphi 0, %s56
    %s57 = sphi 0, %s54
    %s58 = sphi 0, %s57
    %s74 = sphi 0, %s58
    %s78 = sphi 0, %s78
    %s80 = sphi 0, %s78
    %s81 = sphi 0, %s80
    %s95 = sphi 0, %s81
    %s99 = sphi 0, %s99
    %s101 = sphi 0, %s99
    %s102 = sphi 0, %s101
    %s116 = sphi 0, %s102
    %s120 = sphi 0, %s120
    %s122 = sphi 0, %s120
    %s123 = sphi 0, %s122
    %s137 = sphi 0, %s123
    %s141 = sphi 0, %s141
    %s143 = sphi 0, %s141
    %s144 = sphi 0, %s143
    %s158 = sphi 0, %s144
    %s162 = sphi 0, %s162
    %s164 = sphi 0, %s162
    %s165 = sphi 0, %s164
    %s179 = sphi 0, %s165
    %s183 = sphi 0, %s183
    %s185 = sphi 0, %s183
    %s186 = sphi 0, %s185
    %s200 = sphi 0, %s186
    %s204 = sphi 0, %s204
    %s206 = sphi 0, %s204
    %s207 = sphi 0, %s206
    %s221 = sphi 0, %s207
    %s225 = sphi 0, %s225
    %s227 = sphi 0, %s225
    %s228 = sphi 0, %s227
    %s242 = sphi 0, %s228
    %s246 = sphi 0, %s246
    %s248 = sphi 0, %s246
    %s249 = sphi 0, %s248
    %s263 = sphi 0, %s249
    %s267 = sphi 0, %s267
    %s269 = sphi 0, %s267
    %s270 = sphi 0, %s269
    %s284 = sphi 0, %s270
    %s290 = sphi 0, %s292
    %s293 = sphi 0, %s290
    %s294 = sphi 0, %s293
    %s310 = sphi 0, %s294
  $region4: #{_lambda_.1} parent=0 // loop_header_branch
    %21 = sbr.rel (%p19) target = $region8
  $region5: #{_lambda_.1} parent=0 // loop_body
    %s23 = ssub.s32 %s18, 1
    %s24 = ssub.s32 %s18, 2
    %s25 = sadd.s32 %s18, 1
    %s26 = ssub.s32 %s18, %s25
    %p27 = scmp.eq.s32.totalorder %s26, 0
    %s29 = sadd.s32 %s28, 1
    %s30 = scalar_select %p27, %s28, %s29
    %p33 = pneg %p27
    %p34 = scmp.eq.s32.totalorder %s18, 1
    %p35 = por %p33, %p34
    %p36 = scmp.ne.s32.totalorder %s28, %s31
    %p37 = scmp.eq.s32.totalorder %s18, 0
    %p38 = por %p36, %p37
    %p39 = scmp.ne.s32.totalorder %s28, %s31
    %p40 = scmp.eq.s32.totalorder %s23, 1
    %p41 = por %p39, %p40
    %p42 = scmp.ne.s32.totalorder %s31, %s32
    %p43 = scmp.eq.s32.totalorder %s23, 0
    %p44 = por %p42, %p43
    %p45 = scmp.ne.s32.totalorder %s31, %s32
    %p46 = scmp.eq.s32.totalorder %s24, 1
    %p47 = por %p45, %p46
    %p49 = scmp.ne.s32.totalorder %s32, %s48
    %p50 = scmp.eq.s32.totalorder %s24, 0
    %p51 = por %p49, %p50
    %s52 = ssub.s32 %s18, %s25
    %p53 = scmp.eq.s32.totalorder %s52, 0
    %s55 = sadd.s32 %s54, 1
    %s56 = scalar_select %p53, %s54, %s55
    %p59 = pneg %p53
    %p60 = scmp.eq.s32.totalorder %s18, 1
    %p61 = por %p59, %p60
    %p62 = scmp.ne.s32.totalorder %s54, %s57
    %p63 = scmp.eq.s32.totalorder %s18, 0
    %p64 = por %p62, %p63
    %p65 = scmp.ne.s32.totalorder %s54, %s57
    %p66 = scmp.eq.s32.totalorder %s23, 1
    %p67 = por %p65, %p66
    %p68 = scmp.ne.s32.totalorder %s57, %s58
    %p69 = scmp.eq.s32.totalorder %s23, 0
    %p70 = por %p68, %p69
    %p71 = scmp.ne.s32.totalorder %s57, %s58
    %p72 = scmp.eq.s32.totalorder %s24, 1
    %p73 = por %p71, %p72
    %p75 = scmp.ne.s32.totalorder %s58, %s74
    %p76 = scmp.eq.s32.totalorder %s24, 0
    %p77 = por %p75, %p76
    %s79 = sadd.s32 %s78, 1
    %p82 = scmp.eq.s32.totalorder %s18, 1
    %p83 = scmp.ne.s32.totalorder %s78, %s80
    %p84 = scmp.eq.s32.totalorder %s18, 0
    %p85 = por %p83, %p84
    %p86 = scmp.ne.s32.totalorder %s78, %s80
    %p87 = scmp.eq.s32.totalorder %s23, 1
    %p88 = por %p86, %p87
    %p89 = scmp.ne.s32.totalorder %s80, %s81
    %p90 = scmp.eq.s32.totalorder %s23, 0
    %p91 = por %p89, %p90
    %p92 = scmp.ne.s32.totalorder %s80, %s81
    %p93 = scmp.eq.s32.totalorder %s24, 1
    %p94 = por %p92, %p93
    %p96 = scmp.ne.s32.totalorder %s81, %s95
    %p97 = scmp.eq.s32.totalorder %s24, 0
    %p98 = por %p96, %p97
    %s100 = sadd.s32 %s99, 1
    %p103 = scmp.eq.s32.totalorder %s18, 1
    %p104 = scmp.ne.s32.totalorder %s99, %s101
    %p105 = scmp.eq.s32.totalorder %s18, 0
    %p106 = por %p104, %p105
    %p107 = scmp.ne.s32.totalorder %s99, %s101
    %p108 = scmp.eq.s32.totalorder %s23, 1
    %p109 = por %p107, %p108
    %p110 = scmp.ne.s32.totalorder %s101, %s102
    %p111 = scmp.eq.s32.totalorder %s23, 0
    %p112 = por %p110, %p111
    %p113 = scmp.ne.s32.totalorder %s101, %s102
    %p114 = scmp.eq.s32.totalorder %s24, 1
    %p115 = por %p113, %p114
    %p117 = scmp.ne.s32.totalorder %s102, %s116
    %p118 = scmp.eq.s32.totalorder %s24, 0
    %p119 = por %p117, %p118
    %s121 = sadd.s32 %s120, 1
    %p124 = scmp.eq.s32.totalorder %s18, 1
    %p125 = scmp.ne.s32.totalorder %s120, %s122
    %p126 = scmp.eq.s32.totalorder %s18, 0
    %p127 = por %p125, %p126
    %p128 = scmp.ne.s32.totalorder %s120, %s122
    %p129 = scmp.eq.s32.totalorder %s23, 1
    %p130 = por %p128, %p129
    %p131 = scmp.ne.s32.totalorder %s122, %s123
    %p132 = scmp.eq.s32.totalorder %s23, 0
    %p133 = por %p131, %p132
    %p134 = scmp.ne.s32.totalorder %s122, %s123
    %p135 = scmp.eq.s32.totalorder %s24, 1
    %p136 = por %p134, %p135
    %p138 = scmp.ne.s32.totalorder %s123, %s137
    %p139 = scmp.eq.s32.totalorder %s24, 0
    %p140 = por %p138, %p139
    %s142 = sadd.s32 %s141, 1
    %p145 = scmp.eq.s32.totalorder %s18, 1
    %p146 = scmp.ne.s32.totalorder %s141, %s143
    %p147 = scmp.eq.s32.totalorder %s18, 0
    %p148 = por %p146, %p147
    %p149 = scmp.ne.s32.totalorder %s141, %s143
    %p150 = scmp.eq.s32.totalorder %s23, 1
    %p151 = por %p149, %p150
    %p152 = scmp.ne.s32.totalorder %s143, %s144
    %p153 = scmp.eq.s32.totalorder %s23, 0
    %p154 = por %p152, %p153
    %p155 = scmp.ne.s32.totalorder %s143, %s144
    %p156 = scmp.eq.s32.totalorder %s24, 1
    %p157 = por %p155, %p156
    %p159 = scmp.ne.s32.totalorder %s144, %s158
    %p160 = scmp.eq.s32.totalorder %s24, 0
    %p161 = por %p159, %p160
    %s163 = sadd.s32 %s162, 1
    %p166 = scmp.eq.s32.totalorder %s18, 1
    %p167 = scmp.ne.s32.totalorder %s162, %s164
    %p168 = scmp.eq.s32.totalorder %s18, 0
    %p169 = por %p167, %p168
    %p170 = scmp.ne.s32.totalorder %s162, %s164
    %p171 = scmp.eq.s32.totalorder %s23, 1
    %p172 = por %p170, %p171
    %p173 = scmp.ne.s32.totalorder %s164, %s165
    %p174 = scmp.eq.s32.totalorder %s23, 0
    %p175 = por %p173, %p174
    %p176 = scmp.ne.s32.totalorder %s164, %s165
    %p177 = scmp.eq.s32.totalorder %s24, 1
    %p178 = por %p176, %p177
    %p180 = scmp.ne.s32.totalorder %s165, %s179
    %p181 = scmp.eq.s32.totalorder %s24, 0
    %p182 = por %p180, %p181
    %s184 = sadd.s32 %s183, 1
    %p187 = scmp.eq.s32.totalorder %s18, 1
    %p188 = scmp.ne.s32.totalorder %s183, %s185
    %p189 = scmp.eq.s32.totalorder %s18, 0
    %p190 = por %p188, %p189
    %p191 = scmp.ne.s32.totalorder %s183, %s185
    %p192 = scmp.eq.s32.totalorder %s23, 1
    %p193 = por %p191, %p192
    %p194 = scmp.ne.s32.totalorder %s185, %s186
    %p195 = scmp.eq.s32.totalorder %s23, 0
    %p196 = por %p194, %p195
    %p197 = scmp.ne.s32.totalorder %s185, %s186
    %p198 = scmp.eq.s32.totalorder %s24, 1
    %p199 = por %p197, %p198
    %p201 = scmp.ne.s32.totalorder %s186, %s200
    %p202 = scmp.eq.s32.totalorder %s24, 0
    %p203 = por %p201, %p202
    %s205 = sadd.s32 %s204, 1
    %p208 = scmp.eq.s32.totalorder %s18, 1
    %p209 = scmp.ne.s32.totalorder %s204, %s206
    %p210 = scmp.eq.s32.totalorder %s18, 0
    %p211 = por %p209, %p210
    %p212 = scmp.ne.s32.totalorder %s204, %s206
    %p213 = scmp.eq.s32.totalorder %s23, 1
    %p214 = por %p212, %p213
    %p215 = scmp.ne.s32.totalorder %s206, %s207
    %p216 = scmp.eq.s32.totalorder %s23, 0
    %p217 = por %p215, %p216
    %p218 = scmp.ne.s32.totalorder %s206, %s207
    %p219 = scmp.eq.s32.totalorder %s24, 1
    %p220 = por %p218, %p219
    %p222 = scmp.ne.s32.totalorder %s207, %s221
    %p223 = scmp.eq.s32.totalorder %s24, 0
    %p224 = por %p222, %p223
    %s226 = sadd.s32 %s225, 1
    %p229 = scmp.eq.s32.totalorder %s18, 1
    %p230 = scmp.ne.s32.totalorder %s225, %s227
    %p231 = scmp.eq.s32.totalorder %s18, 0
    %p232 = por %p230, %p231
    %p233 = scmp.ne.s32.totalorder %s225, %s227
    %p234 = scmp.eq.s32.totalorder %s23, 1
    %p235 = por %p233, %p234
    %p236 = scmp.ne.s32.totalorder %s227, %s228
    %p237 = scmp.eq.s32.totalorder %s23, 0
    %p238 = por %p236, %p237
    %p239 = scmp.ne.s32.totalorder %s227, %s228
    %p240 = scmp.eq.s32.totalorder %s24, 1
    %p241 = por %p239, %p240
    %p243 = scmp.ne.s32.totalorder %s228, %s242
    %p244 = scmp.eq.s32.totalorder %s24, 0
    %p245 = por %p243, %p244
    %s247 = sadd.s32 %s246, 1
    %p250 = scmp.eq.s32.totalorder %s18, 1
    %p251 = scmp.ne.s32.totalorder %s246, %s248
    %p252 = scmp.eq.s32.totalorder %s18, 0
    %p253 = por %p251, %p252
    %p254 = scmp.ne.s32.totalorder %s246, %s248
    %p255 = scmp.eq.s32.totalorder %s23, 1
    %p256 = por %p254, %p255
    %p257 = scmp.ne.s32.totalorder %s248, %s249
    %p258 = scmp.eq.s32.totalorder %s23, 0
    %p259 = por %p257, %p258
    %p260 = scmp.ne.s32.totalorder %s248, %s249
    %p261 = scmp.eq.s32.totalorder %s24, 1
    %p262 = por %p260, %p261
    %p264 = scmp.ne.s32.totalorder %s249, %s263
    %p265 = scmp.eq.s32.totalorder %s24, 0
    %p266 = por %p264, %p265
    %s268 = sadd.s32 %s267, 1
    %p271 = scmp.eq.s32.totalorder %s18, 1
    %p272 = scmp.ne.s32.totalorder %s267, %s269
    %p273 = scmp.eq.s32.totalorder %s18, 0
    %p274 = por %p272, %p273
    %p275 = scmp.ne.s32.totalorder %s267, %s269
    %p276 = scmp.eq.s32.totalorder %s23, 1
    %p277 = por %p275, %p276
    %p278 = scmp.ne.s32.totalorder %s269, %s270
    %p279 = scmp.eq.s32.totalorder %s23, 0
    %p280 = por %p278, %p279
    %p281 = scmp.ne.s32.totalorder %s269, %s270
    %p282 = scmp.eq.s32.totalorder %s24, 1
    %p283 = por %p281, %p282
    %p285 = scmp.ne.s32.totalorder %s270, %s284
    %p286 = scmp.eq.s32.totalorder %s24, 0
    %p287 = por %p285, %p286
    %s288 = ssub.s32 %s18, %s25
    %p289 = scmp.eq.s32.totalorder %s288, 0
    %s291 = sadd.s32 %s290, 1
    %s292 = scalar_select %p289, %s290, %s291
    %p295 = pneg %p289
    %p296 = scmp.eq.s32.totalorder %s18, 1
    %p297 = por %p295, %p296
    %p298 = scmp.ne.s32.totalorder %s290, %s293
    %p299 = scmp.eq.s32.totalorder %s18, 0
    %p300 = por %p298, %p299
    %p301 = scmp.ne.s32.totalorder %s290, %s293
    %p302 = scmp.eq.s32.totalorder %s23, 1
    %p303 = por %p301, %p302
    %p304 = scmp.ne.s32.totalorder %s293, %s294
    %p305 = scmp.eq.s32.totalorder %s23, 0
    %p306 = por %p304, %p305
    %p307 = scmp.ne.s32.totalorder %s293, %s294
    %p308 = scmp.eq.s32.totalorder %s24, 1
    %p309 = por %p307, %p308
    %p311 = scmp.ne.s32.totalorder %s294, %s310
    %p312 = scmp.eq.s32.totalorder %s24, 0
    %p313 = por %p311, %p312
    %p314 = scmp.le.s32.totalorder 1, %s18
    %p315 = scmp.lt.s32.totalorder %s18, 3
    %p316 = pnand %p314, %p315
    %p317 = pneg %p316
    // Predicated region
    $region9: #{_lambda_.1} parent=5 // pred_check
      _
    $region10: #{_lambda_.1} parent=5 // pred_check_branch
      %319 = sbr.rel (%p316) target = $region12
    $region11: #{_lambda_.1} parent=5 // pred_region
      %s320 = ssub.s32 %s18, 1
      // Predicated region
      $region13: #{_lambda_.1} parent=11 // pred_check
        %p321 = pneg %p91
      $region14: #{_lambda_.1} parent=11 // pred_check_branch
        %323 = sbr.rel (%p321) target = $region16
      $region15: #{_lambda_.1} parent=11 // pred_region
        _
      $region16: #{_lambda_.1} parent=11 // pred_fallthru
        _
      // Predicated region
      $region17: #{_lambda_.1} parent=11 // pred_check
        %p324 = pneg %p112
      $region18: #{_lambda_.1} parent=11 // pred_check_branch
        %326 = sbr.rel (%p324) target = $region20
      $region19: #{_lambda_.1} parent=11 // pred_region
        _
      $region20: #{_lambda_.1} parent=11 // pred_fallthru
        _
      // Predicated region
      $region21: #{_lambda_.1} parent=11 // pred_check
        %p327 = pneg %p133
      $region22: #{_lambda_.1} parent=11 // pred_check_branch
        %329 = sbr.rel (%p327) target = $region24
      $region23: #{_lambda_.1} parent=11 // pred_region
        _
      $region24: #{_lambda_.1} parent=11 // pred_fallthru
        _
      // Predicated region
      $region25: #{_lambda_.1} parent=11 // pred_check
        %p330 = pneg %p154
      $region26: #{_lambda_.1} parent=11 // pred_check_branch
        %332 = sbr.rel (%p330) target = $region28
      $region27: #{_lambda_.1} parent=11 // pred_region
        _
      $region28: #{_lambda_.1} parent=11 // pred_fallthru
        _
      // Predicated region
      $region29: #{_lambda_.1} parent=11 // pred_check
        %p333 = pneg %p175
      $region30: #{_lambda_.1} parent=11 // pred_check_branch
        %335 = sbr.rel (%p333) target = $region32
      $region31: #{_lambda_.1} parent=11 // pred_region
        _
      $region32: #{_lambda_.1} parent=11 // pred_fallthru
        _
      // Predicated region
      $region33: #{_lambda_.1} parent=11 // pred_check
        %p336 = pneg %p196
      $region34: #{_lambda_.1} parent=11 // pred_check_branch
        %338 = sbr.rel (%p336) target = $region36
      $region35: #{_lambda_.1} parent=11 // pred_region
        _
      $region36: #{_lambda_.1} parent=11 // pred_fallthru
        _
      // Predicated region
      $region37: #{_lambda_.1} parent=11 // pred_check
        %p339 = pneg %p217
      $region38: #{_lambda_.1} parent=11 // pred_check_branch
        %341 = sbr.rel (%p339) target = $region40
      $region39: #{_lambda_.1} parent=11 // pred_region
        _
      $region40: #{_lambda_.1} parent=11 // pred_fallthru
        _
      // Predicated region
      $region41: #{_lambda_.1} parent=11 // pred_check
        %p342 = pneg %p238
      $region42: #{_lambda_.1} parent=11 // pred_check_branch
        %344 = sbr.rel (%p342) target = $region44
      $region43: #{_lambda_.1} parent=11 // pred_region
        _
      $region44: #{_lambda_.1} parent=11 // pred_fallthru
        _
      // Predicated region
      $region45: #{_lambda_.1} parent=11 // pred_check
        %p345 = pneg %p259
      $region46: #{_lambda_.1} parent=11 // pred_check_branch
        %347 = sbr.rel (%p345) target = $region48
      $region47: #{_lambda_.1} parent=11 // pred_region
        _
      $region48: #{_lambda_.1} parent=11 // pred_fallthru
        _
      // Predicated region
      $region49: #{_lambda_.1} parent=11 // pred_check
        %p348 = pneg %p280
      $region50: #{_lambda_.1} parent=11 // pred_check_branch
        %350 = sbr.rel (%p348) target = $region52
      $region51: #{_lambda_.1} parent=11 // pred_region
        _
      $region52: #{_lambda_.1} parent=11 // pred_fallthru
        _
    $region12: #{_lambda_.1} parent=5 // pred_fallthru
      _
    %p351 = scmp.lt.s32.totalorder %s18, 2
    // Predicated region
    $region53: #{_lambda_.1} parent=5 // pred_check
      %p352 = pneg %p351
    $region54: #{_lambda_.1} parent=5 // pred_check_branch
      %354 = sbr.rel (%p352) target = $region56
    $region55: #{_lambda_.1} parent=5 // pred_region
      // Predicated region
      $region57: #{_lambda_.1} parent=55 // pred_check
        %p355 = pneg %p38
      $region58: #{_lambda_.1} parent=55 // pred_check_branch
        %357 = sbr.rel (%p355) target = $region60
      $region59: #{_lambda_.1} parent=55 // pred_region
        %p358 = scmp.lt.s32.totalorder %s18, 1
        %s359 = scalar_select %p358, %s18, 1
        %s360 = smul.addr %s359, 32
        %s361 = smul.addr %s360, 8
        %s362 = scalar_lea.vmem %s0, %s361
      $region60: #{_lambda_.1} parent=55 // pred_fallthru
        _
      // Predicated region
      $region61: #{_lambda_.1} parent=55 // pred_check
        %p363 = pneg %p64
      $region62: #{_lambda_.1} parent=55 // pred_check_branch
        %365 = sbr.rel (%p363) target = $region64
      $region63: #{_lambda_.1} parent=55 // pred_region
        %p366 = scmp.lt.s32.totalorder %s18, 1
        %s367 = scalar_select %p366, %s18, 1
        %s368 = smul.addr %s367, 32
        %s369 = smul.addr %s368, 8
        %s370 = scalar_lea.vmem %s1, %s369
      $region64: #{_lambda_.1} parent=55 // pred_fallthru
        _
    $region56: #{_lambda_.1} parent=5 // pred_fallthru
      _
    %p371 = scmp.le.s32.totalorder 1, %s18
    %p372 = scmp.lt.s32.totalorder %s18, 3
    %p373 = pnand %p371, %p372
    %p374 = pneg %p373
    // Predicated region
    $region65: #{_lambda_.1} parent=5 // pred_check
      _
    $region66: #{_lambda_.1} parent=5 // pred_check_branch
      %376 = sbr.rel (%p373) target = $region68
    $region67: #{_lambda_.1} parent=5 // pred_region
      %s377 = ssub.s32 %s18, 1
      %p378 = scmp.lt.s32.totalorder %s23, 1
      %s379 = scalar_select %p378, %s23, 1
      %s380 = smul.addr %s379, 32
      %s381 = smul.addr %s380, 8
      %s382 = scalar_lea.vmem %s0, %s381
      %p383 = pneg %p44
      %p384 = pneg %p41
      %p385 = scmp.lt.s32.totalorder %s23, 1
      %s386 = scalar_select %p385, %s23, 1
      %s387 = smul.addr %s386, 32
      %s388 = smul.addr %s387, 8
      %s389 = scalar_lea.vmem %s1, %s388
      %p390 = pneg %p70
      %p391 = pneg %p67
      %p392 = pneg %p91
      %p393 = pneg %p88
      %p394 = pneg %p112
      %p395 = pneg %p109
      %p396 = pneg %p133
      %p397 = pneg %p130
      %p398 = pneg %p154
      %p399 = pneg %p151
      %p400 = pneg %p175
      %p401 = pneg %p172
      %p402 = pneg %p196
      %p403 = pneg %p193
      %p404 = pneg %p217
      %p405 = pneg %p214
      %p406 = pneg %p238
      %p407 = pneg %p235
      %p408 = pneg %p259
      %p409 = pneg %p256
      %p410 = pneg %p280
      %p411 = pneg %p277
      %p412 = pneg %p306
      %p413 = pneg %p303
      %p414 = scmp.lt.s32.totalorder %s23, 1
      %s415 = scalar_select %p414, %s23, 1
      %s416 = smul.addr %s415, 2
      %s417 = smul.addr %s416, 8
      %s418 = scalar_lea.vmem %s12, %s417
      %p419 = scmp.lt.s32.totalorder %s23, 1
      %s420 = scalar_select %p419, %s23, 1
      %s421 = smul.addr %s420, 32
      %s422 = smul.addr %s421, 8
      %s423 = scalar_lea.vmem %s0, %s422
      %p424 = scmp.lt.s32.totalorder %s23, 1
      %s425 = scalar_select %p424, %s23, 1
      %s426 = smul.addr %s425, 32
      %s427 = smul.addr %s426, 8
      %s428 = scalar_lea.vmem %s1, %s427
      %p429 = scmp.lt.s32.totalorder %s23, 1
      %s430 = scalar_select %p429, %s23, 1
      %s431 = smul.addr %s430, 2
      %s432 = smul.addr %s431, 8
      %s433 = scalar_lea.vmem %s12, %s432
      %v435 = vld [vmem:[%s2] sm:$0xff]
      %v436 = vld [vmem:[%s423] sm:$0xff]
      %v437 = vld [vmem:[%s423 + $0x8] sm:$0xff]
      %v438 = vld [vmem:[%s423 + $0x10] sm:$0xff]
      %v439 = vld [vmem:[%s423 + $0x18] sm:$0xff]
      %v440 = vld [vmem:[%s423 + $0x20] sm:$0xff]
      %v441 = vld [vmem:[%s423 + $0x28] sm:$0xff]
      %v442 = vld [vmem:[%s423 + $0x30] sm:$0xff]
      %v443 = vld [vmem:[%s423 + $0x38] sm:$0xff]
      %v444 = vld [vmem:[%s423 + $0x40] sm:$0xff]
      %v445 = vld [vmem:[%s423 + $0x48] sm:$0xff]
      %v446 = vld [vmem:[%s423 + $0x50] sm:$0xff]
      %v447 = vld [vmem:[%s423 + $0x58] sm:$0xff]
      %v448 = vld [vmem:[%s423 + $0x60] sm:$0xff]
      %v449 = vld [vmem:[%s423 + $0x68] sm:$0xff]
      %v450 = vld [vmem:[%s423 + $0x70] sm:$0xff]
      %v451 = vld [vmem:[%s423 + $0x78] sm:$0xff]
      %v452 = vld [vmem:[%s423 + $0x80] sm:$0xff]
      %v453 = vld [vmem:[%s423 + $0x88] sm:$0xff]
      %v454 = vld [vmem:[%s423 + $0x90] sm:$0xff]
      %v455 = vld [vmem:[%s423 + $0x98] sm:$0xff]
      %v456 = vld [vmem:[%s423 + $0xa0] sm:$0xff]
      %v457 = vld [vmem:[%s423 + $0xa8] sm:$0xff]
      %v458 = vld [vmem:[%s423 + $0xb0] sm:$0xff]
      %v459 = vld [vmem:[%s423 + $0xb8] sm:$0xff]
      %v460 = vld [vmem:[%s423 + $0xc0] sm:$0xff]
      %v461 = vld [vmem:[%s423 + $0xc8] sm:$0xff]
      %v462 = vld [vmem:[%s423 + $0xd0] sm:$0xff]
      %v463 = vld [vmem:[%s423 + $0xd8] sm:$0xff]
      %v464 = vld [vmem:[%s423 + $0xe0] sm:$0xff]
      %v465 = vld [vmem:[%s423 + $0xe8] sm:$0xff]
      %v466 = vld [vmem:[%s423 + $0xf0] sm:$0xff]
      %v467 = vld [vmem:[%s423 + $0xf8] sm:$0xff]
      %vm468 = vcmask 64512
      %v470 = vsel %vm468, %v436, 0
      %v473 = vsel %vm468, %v437, 0
      %v476 = vsel %vm468, %v438, 0
      %v479 = vsel %vm468, %v439, 0
      %v482 = vsel %vm468, %v440, 0
      %v485 = vsel %vm468, %v441, 0
      %v488 = vsel %vm468, %v442, 0
      %v491 = vsel %vm468, %v443, 0
      %v494 = vsel %vm468, %v444, 0
      %v497 = vsel %vm468, %v445, 0
      %v500 = vsel %vm468, %v446, 0
      %v503 = vsel %vm468, %v447, 0
      %v506 = vsel %vm468, %v448, 0
      %v509 = vsel %vm468, %v449, 0
      %v512 = vsel %vm468, %v450, 0
      %v515 = vsel %vm468, %v451, 0
      %v518 = vsel %vm468, %v452, 0
      %v521 = vsel %vm468, %v453, 0
      %v524 = vsel %vm468, %v454, 0
      %v527 = vsel %vm468, %v455, 0
      %v530 = vsel %vm468, %v456, 0
      %v533 = vsel %vm468, %v457, 0
      %v536 = vsel %vm468, %v458, 0
      %v539 = vsel %vm468, %v459, 0
      %v542 = vsel %vm468, %v460, 0
      %v545 = vsel %vm468, %v461, 0
      %v548 = vsel %vm468, %v462, 0
      %v551 = vsel %vm468, %v463, 0
      %v554 = vsel %vm468, %v464, 0
      %v557 = vsel %vm468, %v465, 0
      %v560 = vsel %vm468, %v466, 0
      %v563 = vsel %vm468, %v467, 0
      %565 = vmatprep.subr.mxu0 0.0
      %566 = vmatpush1.msra.mxu0 %v435
      %567 = vmatprep.subr.mxu0 0.0
      %568 = vmatpush1.msra.mxu0 0.0
      %569 = vmatprep.subr.mxu0 0.0
      %570 = vmatpush1.msra.mxu0 0.0
      %571 = vmatprep.subr.mxu0 0.0
      %572 = vmatpush1.msra.mxu0 0.0
      %573 = vmatprep.subr.mxu0 0.0
      %574 = vmatpush1.msra.mxu0 0.0
      %575 = vmatprep.subr.mxu0 0.0
      %576 = vmatpush1.msra.mxu0 0.0
      %577 = vmatprep.subr.mxu0 0.0
      %578 = vmatpush1.msra.mxu0 0.0
      %579 = vmatprep.subr.mxu0 0.0
      %580 = vmatpush1.msra.mxu0 0.0
      %581 = vmatprep.subr.mxu0 0.0
      %582 = vmatpush1.msra.mxu0 0.0
      %583 = vmatprep.subr.mxu0 0.0
      %584 = vmatpush1.msra.mxu0 0.0
      %585 = vmatprep.subr.mxu0 0.0
      %586 = vmatpush1.msra.mxu0 0.0
      %587 = vmatprep.subr.mxu0 0.0
      %588 = vmatpush1.msra.mxu0 0.0
      %589 = vmatprep.subr.mxu0 0.0
      %590 = vmatpush1.msra.mxu0 0.0
      %591 = vmatprep.subr.mxu0 0.0
      %592 = vmatpush1.msra.mxu0 0.0
      %593 = vmatprep.subr.mxu0 0.0
      %594 = vmatpush1.msra.mxu0 0.0
      %595 = vmatprep.subr.mxu0 0.0
      %596 = vmatpush1.msra.mxu0 0.0
      %597 = vmatprep.subr.mxu0 0.0
      %598 = vmatpush1.msra.mxu0 0.0
      %599 = vmatprep.subr.mxu0 0.0
      %600 = vmatpush1.msra.mxu0 0.0
      %601 = vmatprep.subr.mxu0 0.0
      %602 = vmatpush1.msra.mxu0 0.0
      %603 = vmatprep.subr.mxu0 0.0
      %604 = vmatpush1.msra.mxu0 0.0
      %605 = vmatprep.subr.mxu0 0.0
      %606 = vmatpush1.msra.mxu0 0.0
      %607 = vmatprep.subr.mxu0 0.0
      %608 = vmatpush1.msra.mxu0 0.0
      %609 = vmatprep.subr.mxu0 0.0
      %610 = vmatpush1.msra.mxu0 0.0
      %611 = vmatprep.subr.mxu0 0.0
      %612 = vmatpush1.msra.mxu0 0.0
      %613 = vmatprep.subr.mxu0 0.0
      %614 = vmatpush1.msra.mxu0 0.0
      %615 = vmatprep.subr.mxu0 0.0
      %616 = vmatpush1.msra.mxu0 0.0
      %617 = vmatprep.subr.mxu0 0.0
      %618 = vmatpush1.msra.mxu0 0.0
      %619 = vmatprep.subr.mxu0 0.0
      %620 = vmatpush1.msra.mxu0 0.0
      %621 = vmatprep.subr.mxu0 0.0
      %622 = vmatpush1.msra.mxu0 0.0
      %623 = vmatprep.subr.mxu0 0.0
      %624 = vmatpush1.msra.mxu0 0.0
      %625 = vmatprep.subr.mxu0 0.0
      %626 = vmatpush1.msra.mxu0 0.0
      %627 = vmatprep.subr.mxu0 0.0
      %628 = vmatpush1.msra.mxu0 0.0
      %629 = vmatprep.mubr.f32.mxu0 0.0
      %630 = vmatmul.mubr.f32.gmra.mrb[0].mxu0 %v470
      %v631 = vpop.f32.mrb[0].mxu0
      %v632 = vadd.f32 0.0, %v631
      %v633 = vpop.f32.mrb[0].mxu0
      %634 = vmatprep.mubr.f32.mxu0 0.0
      %635 = vmatmul.mubr.f32.gmra.mrb[0].mxu0 %v473
      %v636 = vpop.f32.mrb[0].mxu0
      %v637 = vadd.f32 0.0, %v636
      %v638 = vpop.f32.mrb[0].mxu0
      %639 = vmatprep.mubr.f32.mxu0 0.0
      %640 = vmatmul.mubr.f32.gmra.mrb[0].mxu0 %v476
      %v641 = vpop.f32.mrb[0].mxu0
      %v642 = vadd.f32 0.0, %v641
      %v643 = vpop.f32.mrb[0].mxu0
      %644 = vmatprep.mubr.f32.mxu0 0.0
      %645 = vmatmul.mubr.f32.gmra.mrb[0].mxu0 %v479
      %v646 = vpop.f32.mrb[0].mxu0
      %v647 = vadd.f32 0.0, %v646
      %v648 = vpop.f32.mrb[0].mxu0
      %649 = vmatprep.mubr.f32.mxu0 0.0
      %650 = vmatmul.mubr.f32.gmra.mrb[0].mxu0 %v482
      %v651 = vpop.f32.mrb[0].mxu0
      %v652 = vadd.f32 0.0, %v651
      %v653 = vpop.f32.mrb[0].mxu0
      %654 = vmatprep.mubr.f32.mxu0 0.0
      %655 = vmatmul.mubr.f32.gmra.mrb[0].mxu0 %v485
      %v656 = vpop.f32.mrb[0].mxu0
      %v657 = vadd.f32 0.0, %v656
      %v658 = vpop.f32.mrb[0].mxu0
      %659 = vmatprep.mubr.f32.mxu0 0.0
      %660 = vmatmul.mubr.f32.gmra.mrb[0].mxu0 %v488
      %v661 = vpop.f32.mrb[0].mxu0
      %v662 = vadd.f32 0.0, %v661
      %v663 = vpop.f32.mrb[0].mxu0
      %664 = vmatprep.mubr.f32.mxu0 0.0
      %665 = vmatmul.mubr.f32.gmra.mrb[0].mxu0 %v491
      %v666 = vpop.f32.mrb[0].mxu0
      %v667 = vadd.f32 0.0, %v666
      %v668 = vpop.f32.mrb[0].mxu0
      %669 = vmatprep.mubr.f32.mxu0 0.0
      %670 = vmatmul.mubr.f32.gmra.mrb[0].mxu0 %v494
      %v671 = vpop.f32.mrb[0].mxu0
      %v672 = vadd.f32 0.0, %v671
      %v673 = vpop.f32.mrb[0].mxu0
      %674 = vmatprep.mubr.f32.mxu0 0.0
      %675 = vmatmul.mubr.f32.gmra.mrb[0].mxu0 %v497
      %v676 = vpop.f32.mrb[0].mxu0
      %v677 = vadd.f32 0.0, %v676
      %v678 = vpop.f32.mrb[0].mxu0
      %679 = vmatprep.mubr.f32.mxu0 0.0
      %680 = vmatmul.mubr.f32.gmra.mrb[0].mxu0 %v500
      %v681 = vpop.f32.mrb[0].mxu0
      %v682 = vadd.f32 0.0, %v681
      %v683 = vpop.f32.mrb[0].mxu0
      %684 = vmatprep.mubr.f32.mxu0 0.0
      %685 = vmatmul.mubr.f32.gmra.mrb[0].mxu0 %v503
      %v686 = vpop.f32.mrb[0].mxu0
      %v687 = vadd.f32 0.0, %v686
      %v688 = vpop.f32.mrb[0].mxu0
      %689 = vmatprep.mubr.f32.mxu0 0.0
      %690 = vmatmul.mubr.f32.gmra.mrb[0].mxu0 %v506
      %v691 = vpop.f32.mrb[0].mxu0
      %v692 = vadd.f32 0.0, %v691
      %v693 = vpop.f32.mrb[0].mxu0
      %694 = vmatprep.mubr.f32.mxu0 0.0
      %695 = vmatmul.mubr.f32.gmra.mrb[0].mxu0 %v509
      %v696 = vpop.f32.mrb[0].mxu0
      %v697 = vadd.f32 0.0, %v696
      %v698 = vpop.f32.mrb[0].mxu0
      %699 = vmatprep.mubr.f32.mxu0 0.0
      %700 = vmatmul.mubr.f32.gmra.mrb[0].mxu0 %v512
      %v701 = vpop.f32.mrb[0].mxu0
      %v702 = vadd.f32 0.0, %v701
      %v703 = vpop.f32.mrb[0].mxu0
      %704 = vmatprep.mubr.f32.mxu0 0.0
      %705 = vmatmul.mubr.f32.gmra.mrb[0].mxu0 %v515
      %v706 = vpop.f32.mrb[0].mxu0
      %v707 = vadd.f32 0.0, %v706
      %v708 = vpop.f32.mrb[0].mxu0
      %709 = vmatprep.mubr.f32.mxu0 0.0
      %710 = vmatmul.mubr.f32.gmra.mrb[0].mxu0 %v518
      %v711 = vpop.f32.mrb[0].mxu0
      %v712 = vadd.f32 0.0, %v711
      %v713 = vpop.f32.mrb[0].mxu0
      %714 = vmatprep.mubr.f32.mxu0 0.0
      %715 = vmatmul.mubr.f32.gmra.mrb[0].mxu0 %v521
      %v716 = vpop.f32.mrb[0].mxu0
      %v717 = vadd.f32 0.0, %v716
      %v718 = vpop.f32.mrb[0].mxu0
      %719 = vmatprep.mubr.f32.mxu0 0.0
      %720 = vmatmul.mubr.f32.gmra.mrb[0].mxu0 %v524
      %v721 = vpop.f32.mrb[0].mxu0
      %v722 = vadd.f32 0.0, %v721
      %v723 = vpop.f32.mrb[0].mxu0
      %724 = vmatprep.mubr.f32.mxu0 0.0
      %725 = vmatmul.mubr.f32.gmra.mrb[0].mxu0 %v527
      %v726 = vpop.f32.mrb[0].mxu0
      %v727 = vadd.f32 0.0, %v726
      %v728 = vpop.f32.mrb[0].mxu0
      %729 = vmatprep.mubr.f32.mxu0 0.0
      %730 = vmatmul.mubr.f32.gmra.mrb[0].mxu0 %v530
      %v731 = vpop.f32.mrb[0].mxu0
      %v732 = vadd.f32 0.0, %v731
      %v733 = vpop.f32.mrb[0].mxu0
      %734 = vmatprep.mubr.f32.mxu0 0.0
      %735 = vmatmul.mubr.f32.gmra.mrb[0].mxu0 %v533
      %v736 = vpop.f32.mrb[0].mxu0
      %v737 = vadd.f32 0.0, %v736
      %v738 = vpop.f32.mrb[0].mxu0
      %739 = vmatprep.mubr.f32.mxu0 0.0
      %740 = vmatmul.mubr.f32.gmra.mrb[0].mxu0 %v536
      %v741 = vpop.f32.mrb[0].mxu0
      %v742 = vadd.f32 0.0, %v741
      %v743 = vpop.f32.mrb[0].mxu0
      %744 = vmatprep.mubr.f32.mxu0 0.0
      %745 = vmatmul.mubr.f32.gmra.mrb[0].mxu0 %v539
      %v746 = vpop.f32.mrb[0].mxu0
      %v747 = vadd.f32 0.0, %v746
      %v748 = vpop.f32.mrb[0].mxu0
      %749 = vmatprep.mubr.f32.mxu0 0.0
      %750 = vmatmul.mubr.f32.gmra.mrb[0].mxu0 %v542
      %v751 = vpop.f32.mrb[0].mxu0
      %v752 = vadd.f32 0.0, %v751
      %v753 = vpop.f32.mrb[0].mxu0
      %754 = vmatprep.mubr.f32.mxu0 0.0
      %755 = vmatmul.mubr.f32.gmra.mrb[0].mxu0 %v545
      %v756 = vpop.f32.mrb[0].mxu0
      %v757 = vadd.f32 0.0, %v756
      %v758 = vpop.f32.mrb[0].mxu0
      %759 = vmatprep.mubr.f32.mxu0 0.0
      %760 = vmatmul.mubr.f32.gmra.mrb[0].mxu0 %v548
      %v761 = vpop.f32.mrb[0].mxu0
      %v762 = vadd.f32 0.0, %v761
      %v763 = vpop.f32.mrb[0].mxu0
      %764 = vmatprep.mubr.f32.mxu0 0.0
      %765 = vmatmul.mubr.f32.gmra.mrb[0].mxu0 %v551
      %v766 = vpop.f32.mrb[0].mxu0
      %v767 = vadd.f32 0.0, %v766
      %v768 = vpop.f32.mrb[0].mxu0
      %769 = vmatprep.mubr.f32.mxu0 0.0
      %770 = vmatmul.mubr.f32.gmra.mrb[0].mxu0 %v554
      %v771 = vpop.f32.mrb[0].mxu0
      %v772 = vadd.f32 0.0, %v771
      %v773 = vpop.f32.mrb[0].mxu0
      %774 = vmatprep.mubr.f32.mxu0 0.0
      %775 = vmatmul.mubr.f32.gmra.mrb[0].mxu0 %v557
      %v776 = vpop.f32.mrb[0].mxu0
      %v777 = vadd.f32 0.0, %v776
      %v778 = vpop.f32.mrb[0].mxu0
      %779 = vmatprep.mubr.f32.mxu0 0.0
      %780 = vmatmul.mubr.f32.gmra.mrb[0].mxu0 %v560
      %v781 = vpop.f32.mrb[0].mxu0
      %v782 = vadd.f32 0.0, %v781
      %v783 = vpop.f32.mrb[0].mxu0
      %784 = vmatprep.mubr.f32.mxu0 0.0
      %785 = vmatmul.mubr.f32.gmra.mrb[0].mxu0 %v563
      %v786 = vpop.f32.mrb[0].mxu0
      %v787 = vadd.f32 0.0, %v786
      %v788 = vpop.f32.mrb[0].mxu0
      %789 = vdwg.mxu0
      %vm790 = vcmask 523264
      %v791 = vsel %vm790, %v632, -inf
      %v792 = vsel %vm790, %v637, -inf
      %v793 = vmax.f32 %v791, %v792
      %v794 = vsel %vm790, %v642, -inf
      %v795 = vmax.f32 %v793, %v794
      %v796 = vsel %vm790, %v647, -inf
      %v797 = vmax.f32 %v795, %v796
      %v798 = vsel %vm790, %v652, -inf
      %v799 = vmax.f32 %v797, %v798
      %v800 = vsel %vm790, %v657, -inf
      %v801 = vmax.f32 %v799, %v800
      %v802 = vsel %vm790, %v662, -inf
      %v803 = vmax.f32 %v801, %v802
      %v804 = vsel %vm790, %v667, -inf
      %v805 = vmax.f32 %v803, %v804
      %v806 = vrot.slane %v805, 4
      %v807 = vmax.f32 %v805, %v806
      %v808 = vrot.slane %v807, 2
      %v809 = vmax.f32 %v807, %v808
      %v810 = vrot.slane %v809, 1
      %v811 = vmax.f32 %v809, %v810
      %v812 = vsel %vm790, %v672, -inf
      %v813 = vsel %vm790, %v677, -inf
      %v814 = vmax.f32 %v812, %v813
      %v815 = vsel %vm790, %v682, -inf
      %v816 = vmax.f32 %v814, %v815
      %v817 = vsel %vm790, %v687, -inf
      %v818 = vmax.f32 %v816, %v817
      %v819 = vsel %vm790, %v692, -inf
      %v820 = vmax.f32 %v818, %v819
      %v821 = vsel %vm790, %v697, -inf
      %v822 = vmax.f32 %v820, %v821
      %v823 = vsel %vm790, %v702, -inf
      %v824 = vmax.f32 %v822, %v823
      %v825 = vsel %vm790, %v707, -inf
      %v826 = vmax.f32 %v824, %v825
      %v827 = vrot.slane %v826, 4
      %v828 = vmax.f32 %v826, %v827
      %v829 = vrot.slane %v828, 2
      %v830 = vmax.f32 %v828, %v829
      %v831 = vrot.slane %v830, 1
      %v832 = vmax.f32 %v830, %v831
      %v833 = vsel %vm790, %v712, -inf
      %v834 = vsel %vm790, %v717, -inf
      %v835 = vmax.f32 %v833, %v834
      %v836 = vsel %vm790, %v722, -inf
      %v837 = vmax.f32 %v835, %v836
      %v838 = vsel %vm790, %v727, -inf
      %v839 = vmax.f32 %v837, %v838
      %v840 = vsel %vm790, %v732, -inf
      %v841 = vmax.f32 %v839, %v840
      %v842 = vsel %vm790, %v737, -inf
      %v843 = vmax.f32 %v841, %v842
      %v844 = vsel %vm790, %v742, -inf
      %v845 = vmax.f32 %v843, %v844
      %v846 = vsel %vm790, %v747, -inf
      %v847 = vmax.f32 %v845, %v846
      %v848 = vrot.slane %v847, 4
      %v849 = vmax.f32 %v847, %v848
      %v850 = vrot.slane %v849, 2
      %v851 = vmax.f32 %v849, %v850
      %v852 = vrot.slane %v851, 1
      %v853 = vmax.f32 %v851, %v852
      %v854 = vsel %vm790, %v752, -inf
      %v855 = vsel %vm790, %v757, -inf
      %v856 = vmax.f32 %v854, %v855
      %v857 = vsel %vm790, %v762, -inf
      %v858 = vmax.f32 %v856, %v857
      %v859 = vsel %vm790, %v767, -inf
      %v860 = vmax.f32 %v858, %v859
      %v861 = vsel %vm790, %v772, -inf
      %v862 = vmax.f32 %v860, %v861
      %v863 = vsel %vm790, %v777, -inf
      %v864 = vmax.f32 %v862, %v863
      %v865 = vsel %vm790, %v782, -inf
      %v866 = vmax.f32 %v864, %v865
      %v867 = vsel %vm790, %v787, -inf
      %v868 = vmax.f32 %v866, %v867
      %v869 = vrot.slane %v868, 4
      %v870 = vmax.f32 %v868, %v869
      %v871 = vrot.slane %v870, 2
      %v872 = vmax.f32 %v870, %v871
      %v873 = vrot.slane %v872, 1
      %v874 = vmax.f32 %v872, %v873
      %v875 = vmax.f32 %v811, 0.0
      %v876 = vmax.f32 %v832, 0.0
      %v877 = vmax.f32 %v853, 0.0
      %v878 = vmax.f32 %v874, 0.0
      %vm883 = vcmask 1041409
      %v884 = vsel %vm883, %v876, %v875
      %vm885 = vcmask 1042434
      %v886 = vsel %vm885, %v877, %v884
      %vm887 = vcmask 1043459
      %v888 = vsel %vm887, %v878, %v886
      %vm890 = vcmask 1043456
      %v891 = vsel %vm890, %v888, 0.0
      %v892 = vld [vmem:[%s428] sm:$0xff]
      %v893 = vld [vmem:[%s428 + $0x8] sm:$0xff]
      %v894 = vld [vmem:[%s428 + $0x10] sm:$0xff]
      %v895 = vld [vmem:[%s428 + $0x18] sm:$0xff]
      %v896 = vld [vmem:[%s428 + $0x20] sm:$0xff]
      %v897 = vld [vmem:[%s428 + $0x28] sm:$0xff]
      %v898 = vld [vmem:[%s428 + $0x30] sm:$0xff]
      %v899 = vld [vmem:[%s428 + $0x38] sm:$0xff]
      %v900 = vld [vmem:[%s428 + $0x40] sm:$0xff]
      %v901 = vld [vmem:[%s428 + $0x48] sm:$0xff]
      %v902 = vld [vmem:[%s428 + $0x50] sm:$0xff]
      %v903 = vld [vmem:[%s428 + $0x58] sm:$0xff]
      %v904 = vld [vmem:[%s428 + $0x60] sm:$0xff]
      %v905 = vld [vmem:[%s428 + $0x68] sm:$0xff]
      %v906 = vld [vmem:[%s428 + $0x70] sm:$0xff]
      %v907 = vld [vmem:[%s428 + $0x78] sm:$0xff]
      %v908 = vld [vmem:[%s428 + $0x80] sm:$0xff]
      %v909 = vld [vmem:[%s428 + $0x88] sm:$0xff]
      %v910 = vld [vmem:[%s428 + $0x90] sm:$0xff]
      %v911 = vld [vmem:[%s428 + $0x98] sm:$0xff]
      %v912 = vld [vmem:[%s428 + $0xa0] sm:$0xff]
      %v913 = vld [vmem:[%s428 + $0xa8] sm:$0xff]
      %v914 = vld [vmem:[%s428 + $0xb0] sm:$0xff]
      %v915 = vld [vmem:[%s428 + $0xb8] sm:$0xff]
      %v916 = vld [vmem:[%s428 + $0xc0] sm:$0xff]
      %v917 = vld [vmem:[%s428 + $0xc8] sm:$0xff]
      %v918 = vld [vmem:[%s428 + $0xd0] sm:$0xff]
      %v919 = vld [vmem:[%s428 + $0xd8] sm:$0xff]
      %v920 = vld [vmem:[%s428 + $0xe0] sm:$0xff]
      %v921 = vld [vmem:[%s428 + $0xe8] sm:$0xff]
      %v922 = vld [vmem:[%s428 + $0xf0] sm:$0xff]
      %v923 = vld [vmem:[%s428 + $0xf8] sm:$0xff]
      %v925 = vsel %vm468, %v892, 0
      %v928 = vsel %vm468, %v893, 0
      %v931 = vsel %vm468, %v894, 0
      %v934 = vsel %vm468, %v895, 0
      %v937 = vsel %vm468, %v896, 0
      %v940 = vsel %vm468, %v897, 0
      %v943 = vsel %vm468, %v898, 0
      %v946 = vsel %vm468, %v899, 0
      %v949 = vsel %vm468, %v900, 0
      %v952 = vsel %vm468, %v901, 0
      %v955 = vsel %vm468, %v902, 0
      %v958 = vsel %vm468, %v903, 0
      %v961 = vsel %vm468, %v904, 0
      %v964 = vsel %vm468, %v905, 0
      %v967 = vsel %vm468, %v906, 0
      %v970 = vsel %vm468, %v907, 0
      %v973 = vsel %vm468, %v908, 0
      %v976 = vsel %vm468, %v909, 0
      %v979 = vsel %vm468, %v910, 0
      %v982 = vsel %vm468, %v911, 0
      %v985 = vsel %vm468, %v912, 0
      %v988 = vsel %vm468, %v913, 0
      %v991 = vsel %vm468, %v914, 0
      %v994 = vsel %vm468, %v915, 0
      %v997 = vsel %vm468, %v916, 0
      %v1000 = vsel %vm468, %v917, 0
      %v1003 = vsel %vm468, %v918, 0
      %v1006 = vsel %vm468, %v919, 0
      %v1009 = vsel %vm468, %v920, 0
      %v1012 = vsel %vm468, %v921, 0
      %v1015 = vsel %vm468, %v922, 0
      %v1018 = vsel %vm468, %v923, 0
      %1020 = vmatprep.subr.mxu0 0.0
      %1021 = vmatpush1.msra.mxu0 %v435
      %1022 = vmatprep.subr.mxu0 0.0
      %1023 = vmatpush1.msra.mxu0 0.0
      %1024 = vmatprep.subr.mxu0 0.0
      %1025 = vmatpush1.msra.mxu0 0.0
      %1026 = vmatprep.subr.mxu0 0.0
      %1027 = vmatpush1.msra.mxu0 0.0
      %1028 = vmatprep.subr.mxu0 0.0
      %1029 = vmatpush1.msra.mxu0 0.0
      %1030 = vmatprep.subr.mxu0 0.0
      %1031 = vmatpush1.msra.mxu0 0.0
      %1032 = vmatprep.subr.mxu0 0.0
      %1033 = vmatpush1.msra.mxu0 0.0
      %1034 = vmatprep.subr.mxu0 0.0
      %1035 = vmatpush1.msra.mxu0 0.0
      %1036 = vmatprep.subr.mxu0 0.0
      %1037 = vmatpush1.msra.mxu0 0.0
      %1038 = vmatprep.subr.mxu0 0.0
      %1039 = vmatpush1.msra.mxu0 0.0
      %1040 = vmatprep.subr.mxu0 0.0
      %1041 = vmatpush1.msra.mxu0 0.0
      %1042 = vmatprep.subr.mxu0 0.0
      %1043 = vmatpush1.msra.mxu0 0.0
      %1044 = vmatprep.subr.mxu0 0.0
      %1045 = vmatpush1.msra.mxu0 0.0
      %1046 = vmatprep.subr.mxu0 0.0
      %1047 = vmatpush1.msra.mxu0 0.0
      %1048 = vmatprep.subr.mxu0 0.0
      %1049 = vmatpush1.msra.mxu0 0.0
      %1050 = vmatprep.subr.mxu0 0.0
      %1051 = vmatpush1.msra.mxu0 0.0
      %1052 = vmatprep.subr.mxu0 0.0
      %1053 = vmatpush1.msra.mxu0 0.0
      %1054 = vmatprep.subr.mxu0 0.0
      %1055 = vmatpush1.msra.mxu0 0.0
      %1056 = vmatprep.subr.mxu0 0.0
      %1057 = vmatpush1.msra.mxu0 0.0
      %1058 = vmatprep.subr.mxu0 0.0
      %1059 = vmatpush1.msra.mxu0 0.0
      %1060 = vmatprep.subr.mxu0 0.0
      %1061 = vmatpush1.msra.mxu0 0.0
      %1062 = vmatprep.subr.mxu0 0.0
      %1063 = vmatpush1.msra.mxu0 0.0
      %1064 = vmatprep.subr.mxu0 0.0
      %1065 = vmatpush1.msra.mxu0 0.0
      %1066 = vmatprep.subr.mxu0 0.0
      %1067 = vmatpush1.msra.mxu0 0.0
      %1068 = vmatprep.subr.mxu0 0.0
      %1069 = vmatpush1.msra.mxu0 0.0
      %1070 = vmatprep.subr.mxu0 0.0
      %1071 = vmatpush1.msra.mxu0 0.0
      %1072 = vmatprep.subr.mxu0 0.0
      %1073 = vmatpush1.msra.mxu0 0.0
      %1074 = vmatprep.subr.mxu0 0.0
      %1075 = vmatpush1.msra.mxu0 0.0
      %1076 = vmatprep.subr.mxu0 0.0
      %1077 = vmatpush1.msra.mxu0 0.0
      %1078 = vmatprep.subr.mxu0 0.0
      %1079 = vmatpush1.msra.mxu0 0.0
      %1080 = vmatprep.subr.mxu0 0.0
      %1081 = vmatpush1.msra.mxu0 0.0
      %1082 = vmatprep.subr.mxu0 0.0
      %1083 = vmatpush1.msra.mxu0 0.0
      %1084 = vmatprep.mubr.f32.mxu0 0.0
      %1085 = vmatmul.mubr.f32.gmra.mrb[0].mxu0 %v925
      %v1086 = vpop.f32.mrb[0].mxu0
      %v1087 = vadd.f32 0.0, %v1086
      %v1088 = vpop.f32.mrb[0].mxu0
      %1089 = vmatprep.mubr.f32.mxu0 0.0
      %1090 = vmatmul.mubr.f32.gmra.mrb[0].mxu0 %v928
      %v1091 = vpop.f32.mrb[0].mxu0
      %v1092 = vadd.f32 0.0, %v1091
      %v1093 = vpop.f32.mrb[0].mxu0
      %1094 = vmatprep.mubr.f32.mxu0 0.0
      %1095 = vmatmul.mubr.f32.gmra.mrb[0].mxu0 %v931
      %v1096 = vpop.f32.mrb[0].mxu0
      %v1097 = vadd.f32 0.0, %v1096
      %v1098 = vpop.f32.mrb[0].mxu0
      %1099 = vmatprep.mubr.f32.mxu0 0.0
      %1100 = vmatmul.mubr.f32.gmra.mrb[0].mxu0 %v934
      %v1101 = vpop.f32.mrb[0].mxu0
      %v1102 = vadd.f32 0.0, %v1101
      %v1103 = vpop.f32.mrb[0].mxu0
      %1104 = vmatprep.mubr.f32.mxu0 0.0
      %1105 = vmatmul.mubr.f32.gmra.mrb[0].mxu0 %v937
      %v1106 = vpop.f32.mrb[0].mxu0
      %v1107 = vadd.f32 0.0, %v1106
      %v1108 = vpop.f32.mrb[0].mxu0
      %1109 = vmatprep.mubr.f32.mxu0 0.0
      %1110 = vmatmul.mubr.f32.gmra.mrb[0].mxu0 %v940
      %v1111 = vpop.f32.mrb[0].mxu0
      %v1112 = vadd.f32 0.0, %v1111
      %v1113 = vpop.f32.mrb[0].mxu0
      %1114 = vmatprep.mubr.f32.mxu0 0.0
      %1115 = vmatmul.mubr.f32.gmra.mrb[0].mxu0 %v943
      %v1116 = vpop.f32.mrb[0].mxu0
      %v1117 = vadd.f32 0.0, %v1116
      %v1118 = vpop.f32.mrb[0].mxu0
      %1119 = vmatprep.mubr.f32.mxu0 0.0
      %1120 = vmatmul.mubr.f32.gmra.mrb[0].mxu0 %v946
      %v1121 = vpop.f32.mrb[0].mxu0
      %v1122 = vadd.f32 0.0, %v1121
      %v1123 = vpop.f32.mrb[0].mxu0
      %1124 = vmatprep.mubr.f32.mxu0 0.0
      %1125 = vmatmul.mubr.f32.gmra.mrb[0].mxu0 %v949
      %v1126 = vpop.f32.mrb[0].mxu0
      %v1127 = vadd.f32 0.0, %v1126
      %v1128 = vpop.f32.mrb[0].mxu0
      %1129 = vmatprep.mubr.f32.mxu0 0.0
      %1130 = vmatmul.mubr.f32.gmra.mrb[0].mxu0 %v952
      %v1131 = vpop.f32.mrb[0].mxu0
      %v1132 = vadd.f32 0.0, %v1131
      %v1133 = vpop.f32.mrb[0].mxu0
      %1134 = vmatprep.mubr.f32.mxu0 0.0
      %1135 = vmatmul.mubr.f32.gmra.mrb[0].mxu0 %v955
      %v1136 = vpop.f32.mrb[0].mxu0
      %v1137 = vadd.f32 0.0, %v1136
      %v1138 = vpop.f32.mrb[0].mxu0
      %1139 = vmatprep.mubr.f32.mxu0 0.0
      %1140 = vmatmul.mubr.f32.gmra.mrb[0].mxu0 %v958
      %v1141 = vpop.f32.mrb[0].mxu0
      %v1142 = vadd.f32 0.0, %v1141
      %v1143 = vpop.f32.mrb[0].mxu0
      %1144 = vmatprep.mubr.f32.mxu0 0.0
      %1145 = vmatmul.mubr.f32.gmra.mrb[0].mxu0 %v961
      %v1146 = vpop.f32.mrb[0].mxu0
      %v1147 = vadd.f32 0.0, %v1146
      %v1148 = vpop.f32.mrb[0].mxu0
      %1149 = vmatprep.mubr.f32.mxu0 0.0
      %1150 = vmatmul.mubr.f32.gmra.mrb[0].mxu0 %v964
      %v1151 = vpop.f32.mrb[0].mxu0
      %v1152 = vadd.f32 0.0, %v1151
      %v1153 = vpop.f32.mrb[0].mxu0
      %1154 = vmatprep.mubr.f32.mxu0 0.0
      %1155 = vmatmul.mubr.f32.gmra.mrb[0].mxu0 %v967
      %v1156 = vpop.f32.mrb[0].mxu0
      %v1157 = vadd.f32 0.0, %v1156
      %v1158 = vpop.f32.mrb[0].mxu0
      %1159 = vmatprep.mubr.f32.mxu0 0.0
      %1160 = vmatmul.mubr.f32.gmra.mrb[0].mxu0 %v970
      %v1161 = vpop.f32.mrb[0].mxu0
      %v1162 = vadd.f32 0.0, %v1161
      %v1163 = vpop.f32.mrb[0].mxu0
      %1164 = vmatprep.mubr.f32.mxu0 0.0
      %1165 = vmatmul.mubr.f32.gmra.mrb[0].mxu0 %v973
      %v1166 = vpop.f32.mrb[0].mxu0
      %v1167 = vadd.f32 0.0, %v1166
      %v1168 = vpop.f32.mrb[0].mxu0
      %1169 = vmatprep.mubr.f32.mxu0 0.0
      %1170 = vmatmul.mubr.f32.gmra.mrb[0].mxu0 %v976
      %v1171 = vpop.f32.mrb[0].mxu0
      %v1172 = vadd.f32 0.0, %v1171
      %v1173 = vpop.f32.mrb[0].mxu0
      %1174 = vmatprep.mubr.f32.mxu0 0.0
      %1175 = vmatmul.mubr.f32.gmra.mrb[0].mxu0 %v979
      %v1176 = vpop.f32.mrb[0].mxu0
      %v1177 = vadd.f32 0.0, %v1176
      %v1178 = vpop.f32.mrb[0].mxu0
      %1179 = vmatprep.mubr.f32.mxu0 0.0
      %1180 = vmatmul.mubr.f32.gmra.mrb[0].mxu0 %v982
      %v1181 = vpop.f32.mrb[0].mxu0
      %v1182 = vadd.f32 0.0, %v1181
      %v1183 = vpop.f32.mrb[0].mxu0
      %1184 = vmatprep.mubr.f32.mxu0 0.0
      %1185 = vmatmul.mubr.f32.gmra.mrb[0].mxu0 %v985
      %v1186 = vpop.f32.mrb[0].mxu0
      %v1187 = vadd.f32 0.0, %v1186
      %v1188 = vpop.f32.mrb[0].mxu0
      %1189 = vmatprep.mubr.f32.mxu0 0.0
      %1190 = vmatmul.mubr.f32.gmra.mrb[0].mxu0 %v988
      %v1191 = vpop.f32.mrb[0].mxu0
      %v1192 = vadd.f32 0.0, %v1191
      %v1193 = vpop.f32.mrb[0].mxu0
      %1194 = vmatprep.mubr.f32.mxu0 0.0
      %1195 = vmatmul.mubr.f32.gmra.mrb[0].mxu0 %v991
      %v1196 = vpop.f32.mrb[0].mxu0
      %v1197 = vadd.f32 0.0, %v1196
      %v1198 = vpop.f32.mrb[0].mxu0
      %1199 = vmatprep.mubr.f32.mxu0 0.0
      %1200 = vmatmul.mubr.f32.gmra.mrb[0].mxu0 %v994
      %v1201 = vpop.f32.mrb[0].mxu0
      %v1202 = vadd.f32 0.0, %v1201
      %v1203 = vpop.f32.mrb[0].mxu0
      %1204 = vmatprep.mubr.f32.mxu0 0.0
      %1205 = vmatmul.mubr.f32.gmra.mrb[0].mxu0 %v997
      %v1206 = vpop.f32.mrb[0].mxu0
      %v1207 = vadd.f32 0.0, %v1206
      %v1208 = vpop.f32.mrb[0].mxu0
      %1209 = vmatprep.mubr.f32.mxu0 0.0
      %1210 = vmatmul.mubr.f32.gmra.mrb[0].mxu0 %v1000
      %v1211 = vpop.f32.mrb[0].mxu0
      %v1212 = vadd.f32 0.0, %v1211
      %v1213 = vpop.f32.mrb[0].mxu0
      %1214 = vmatprep.mubr.f32.mxu0 0.0
      %1215 = vmatmul.mubr.f32.gmra.mrb[0].mxu0 %v1003
      %v1216 = vpop.f32.mrb[0].mxu0
      %v1217 = vadd.f32 0.0, %v1216
      %v1218 = vpop.f32.mrb[0].mxu0
      %1219 = vmatprep.mubr.f32.mxu0 0.0
      %1220 = vmatmul.mubr.f32.gmra.mrb[0].mxu0 %v1006
      %v1221 = vpop.f32.mrb[0].mxu0
      %v1222 = vadd.f32 0.0, %v1221
      %v1223 = vpop.f32.mrb[0].mxu0
      %1224 = vmatprep.mubr.f32.mxu0 0.0
      %1225 = vmatmul.mubr.f32.gmra.mrb[0].mxu0 %v1009
      %v1226 = vpop.f32.mrb[0].mxu0
      %v1227 = vadd.f32 0.0, %v1226
      %v1228 = vpop.f32.mrb[0].mxu0
      %1229 = vmatprep.mubr.f32.mxu0 0.0
      %1230 = vmatmul.mubr.f32.gmra.mrb[0].mxu0 %v1012
      %v1231 = vpop.f32.mrb[0].mxu0
      %v1232 = vadd.f32 0.0, %v1231
      %v1233 = vpop.f32.mrb[0].mxu0
      %1234 = vmatprep.mubr.f32.mxu0 0.0
      %1235 = vmatmul.mubr.f32.gmra.mrb[0].mxu0 %v1015
      %v1236 = vpop.f32.mrb[0].mxu0
      %v1237 = vadd.f32 0.0, %v1236
      %v1238 = vpop.f32.mrb[0].mxu0
      %1239 = vmatprep.mubr.f32.mxu0 0.0
      %1240 = vmatmul.mubr.f32.gmra.mrb[0].mxu0 %v1018
      %v1241 = vpop.f32.mrb[0].mxu0
      %v1242 = vadd.f32 0.0, %v1241
      %v1243 = vpop.f32.mrb[0].mxu0
      %1244 = vdwg.mxu0
      %v1245 = vsel %vm790, %v1087, -inf
      %v1246 = vsel %vm790, %v1092, -inf
      %v1247 = vmax.f32 %v1245, %v1246
      %v1248 = vsel %vm790, %v1097, -inf
      %v1249 = vmax.f32 %v1247, %v1248
      %v1250 = vsel %vm790, %v1102, -inf
      %v1251 = vmax.f32 %v1249, %v1250
      %v1252 = vsel %vm790, %v1107, -inf
      %v1253 = vmax.f32 %v1251, %v1252
      %v1254 = vsel %vm790, %v1112, -inf
      %v1255 = vmax.f32 %v1253, %v1254
      %v1256 = vsel %vm790, %v1117, -inf
      %v1257 = vmax.f32 %v1255, %v1256
      %v1258 = vsel %vm790, %v1122, -inf
      %v1259 = vmax.f32 %v1257, %v1258
      %v1260 = vrot.slane %v1259, 4
      %v1261 = vmax.f32 %v1259, %v1260
      %v1262 = vrot.slane %v1261, 2
      %v1263 = vmax.f32 %v1261, %v1262
      %v1264 = vrot.slane %v1263, 1
      %v1265 = vmax.f32 %v1263, %v1264
      %v1266 = vsel %vm790, %v1127, -inf
      %v1267 = vsel %vm790, %v1132, -inf
      %v1268 = vmax.f32 %v1266, %v1267
      %v1269 = vsel %vm790, %v1137, -inf
      %v1270 = vmax.f32 %v1268, %v1269
      %v1271 = vsel %vm790, %v1142, -inf
      %v1272 = vmax.f32 %v1270, %v1271
      %v1273 = vsel %vm790, %v1147, -inf
      %v1274 = vmax.f32 %v1272, %v1273
      %v1275 = vsel %vm790, %v1152, -inf
      %v1276 = vmax.f32 %v1274, %v1275
      %v1277 = vsel %vm790, %v1157, -inf
      %v1278 = vmax.f32 %v1276, %v1277
      %v1279 = vsel %vm790, %v1162, -inf
      %v1280 = vmax.f32 %v1278, %v1279
      %v1281 = vrot.slane %v1280, 4
      %v1282 = vmax.f32 %v1280, %v1281
      %v1283 = vrot.slane %v1282, 2
      %v1284 = vmax.f32 %v1282, %v1283
      %v1285 = vrot.slane %v1284, 1
      %v1286 = vmax.f32 %v1284, %v1285
      %v1287 = vsel %vm790, %v1167, -inf
      %v1288 = vsel %vm790, %v1172, -inf
      %v1289 = vmax.f32 %v1287, %v1288
      %v1290 = vsel %vm790, %v1177, -inf
      %v1291 = vmax.f32 %v1289, %v1290
      %v1292 = vsel %vm790, %v1182, -inf
      %v1293 = vmax.f32 %v1291, %v1292
      %v1294 = vsel %vm790, %v1187, -inf
      %v1295 = vmax.f32 %v1293, %v1294
      %v1296 = vsel %vm790, %v1192, -inf
      %v1297 = vmax.f32 %v1295, %v1296
      %v1298 = vsel %vm790, %v1197, -inf
      %v1299 = vmax.f32 %v1297, %v1298
      %v1300 = vsel %vm790, %v1202, -inf
      %v1301 = vmax.f32 %v1299, %v1300
      %v1302 = vrot.slane %v1301, 4
      %v1303 = vmax.f32 %v1301, %v1302
      %v1304 = vrot.slane %v1303, 2
      %v1305 = vmax.f32 %v1303, %v1304
      %v1306 = vrot.slane %v1305, 1
      %v1307 = vmax.f32 %v1305, %v1306
      %v1308 = vsel %vm790, %v1207, -inf
      %v1309 = vsel %vm790, %v1212, -inf
      %v1310 = vmax.f32 %v1308, %v1309
      %v1311 = vsel %vm790, %v1217, -inf
      %v1312 = vmax.f32 %v1310, %v1311
      %v1313 = vsel %vm790, %v1222, -inf
      %v1314 = vmax.f32 %v1312, %v1313
      %v1315 = vsel %vm790, %v1227, -inf
      %v1316 = vmax.f32 %v1314, %v1315
      %v1317 = vsel %vm790, %v1232, -inf
      %v1318 = vmax.f32 %v1316, %v1317
      %v1319 = vsel %vm790, %v1237, -inf
      %v1320 = vmax.f32 %v1318, %v1319
      %v1321 = vsel %vm790, %v1242, -inf
      %v1322 = vmax.f32 %v1320, %v1321
      %v1323 = vrot.slane %v1322, 4
      %v1324 = vmax.f32 %v1322, %v1323
      %v1325 = vrot.slane %v1324, 2
      %v1326 = vmax.f32 %v1324, %v1325
      %v1327 = vrot.slane %v1326, 1
      %v1328 = vmax.f32 %v1326, %v1327
      %v1329 = vmax.f32 %v1265, 0.0
      %v1330 = vmax.f32 %v1286, 0.0
      %v1331 = vmax.f32 %v1307, 0.0
      %v1332 = vmax.f32 %v1328, 0.0
      %v1337 = vsel %vm883, %v1330, %v1329
      %v1338 = vsel %vm885, %v1331, %v1337
      %v1339 = vsel %vm887, %v1332, %v1338
      %v1341 = vsel %vm890, %v1339, 0.0
      %v1342 = vpack.c.bf16 %v891, %v891
      %v1343 = vld [vmem:[%s5] sm:$0xf]
      %v1344 = vld [vmem:[%s5 + $0x4] sm:$0xf]
      %v1345 = vld [vmem:[%s5 + $0x8] sm:$0xf]
      %v1346 = vld [vmem:[%s5 + $0xc] sm:$0xf]
      %v1347 = vld [vmem:[%s5 + $0x10] sm:$0xf]
      %v1348 = vld [vmem:[%s5 + $0x14] sm:$0xf]
      %v1349 = vld [vmem:[%s5 + $0x18] sm:$0xf]
      %v1350 = vld [vmem:[%s5 + $0x1c] sm:$0xf]
      %v1359 = vunpack.c.l.b16 %v1343
      %v1360 = vunpack.c.l.b16 %v1344
      %v1361 = vunpack.c.l.b16 %v1345
      %v1362 = vunpack.c.l.b16 %v1346
      %v1363 = vunpack.c.l.b16 %v1347
      %v1364 = vunpack.c.l.b16 %v1348
      %v1365 = vunpack.c.l.b16 %v1349
      %v1366 = vunpack.c.l.b16 %v1350
      %v1367 = vpack.c.b16 %v1360, %v1359
      %v1368 = vpack.c.b16 %v1362, %v1361
      %v1369 = vpack.c.b16 %v1364, %v1363
      %v1370 = vpack.c.b16 %v1366, %v1365
      %v1376 = vsel %vm790, %v1342, 0
      %1378 = vmatprep.subr.bf16.mxu0 0
      %1379 = vmatpush1.bf16.msra.mxu0 %v1367
      %1380 = vmatprep.subr.bf16.mxu0 0
      %1381 = vmatpush1.bf16.msra.mxu0 %v1368
      %1382 = vmatprep.subr.bf16.mxu0 0
      %1383 = vmatpush1.bf16.msra.mxu0 %v1369
      %1384 = vmatprep.subr.bf16.mxu0 0
      %1385 = vmatpush1.bf16.msra.mxu0 %v1370
      %1386 = vmatprep.subr.bf16.mxu0 0
      %1387 = vmatpush1.bf16.msra.mxu0 0
      %1388 = vmatprep.subr.bf16.mxu0 0
      %1389 = vmatpush1.bf16.msra.mxu0 0
      %1390 = vmatprep.subr.bf16.mxu0 0
      %1391 = vmatpush1.bf16.msra.mxu0 0
      %1392 = vmatprep.subr.bf16.mxu0 0
      %1393 = vmatpush1.bf16.msra.mxu0 0
      %1394 = vmatprep.subr.bf16.mxu0 0
      %1395 = vmatpush1.bf16.msra.mxu0 0
      %1396 = vmatprep.subr.bf16.mxu0 0
      %1397 = vmatpush1.bf16.msra.mxu0 0
      %1398 = vmatprep.subr.bf16.mxu0 0
      %1399 = vmatpush1.bf16.msra.mxu0 0
      %1400 = vmatprep.subr.bf16.mxu0 0
      %1401 = vmatpush1.bf16.msra.mxu0 0
      %1402 = vmatprep.subr.bf16.mxu0 0
      %1403 = vmatpush1.bf16.msra.mxu0 0
      %1404 = vmatprep.subr.bf16.mxu0 0
      %1405 = vmatpush1.bf16.msra.mxu0 0
      %1406 = vmatprep.subr.bf16.mxu0 0
      %1407 = vmatpush1.bf16.msra.mxu0 0
      %1408 = vmatprep.subr.bf16.mxu0 0
      %1409 = vmatpush1.bf16.msra.mxu0 0
      %1410 = vmatprep.mubr.bf16.mxu0 0
      %1411 = vmatmul.mubr.bf16.gmra.mrb[0].mxu0 %v1376
      %v1412 = vpop.f32.mrb[0].mxu0
      %v1413 = vadd.f32 0.0, %v1412
      %v1414 = vpop.f32.mrb[0].mxu0
      %v1415 = vpop.f32.mrb[0].mxu0
      %v1416 = vpop.f32.mrb[0].mxu0
      %1417 = vdwg.mxu0
      %v1418 = vpack.c.bf16 %v1341, %v1341
      %v1419 = vld [vmem:[%s6] sm:$0xf]
      %v1420 = vld [vmem:[%s6 + $0x4] sm:$0xf]
      %v1421 = vld [vmem:[%s6 + $0x8] sm:$0xf]
      %v1422 = vld [vmem:[%s6 + $0xc] sm:$0xf]
      %v1423 = vld [vmem:[%s6 + $0x10] sm:$0xf]
      %v1424 = vld [vmem:[%s6 + $0x14] sm:$0xf]
      %v1425 = vld [vmem:[%s6 + $0x18] sm:$0xf]
      %v1426 = vld [vmem:[%s6 + $0x1c] sm:$0xf]
      %v1435 = vunpack.c.l.b16 %v1419
      %v1436 = vunpack.c.l.b16 %v1420
      %v1437 = vunpack.c.l.b16 %v1421
      %v1438 = vunpack.c.l.b16 %v1422
      %v1439 = vunpack.c.l.b16 %v1423
      %v1440 = vunpack.c.l.b16 %v1424
      %v1441 = vunpack.c.l.b16 %v1425
      %v1442 = vunpack.c.l.b16 %v1426
      %v1443 = vpack.c.b16 %v1436, %v1435
      %v1444 = vpack.c.b16 %v1438, %v1437
      %v1445 = vpack.c.b16 %v1440, %v1439
      %v1446 = vpack.c.b16 %v1442, %v1441
      %v1452 = vsel %vm790, %v1418, 0
      %1454 = vmatprep.subr.bf16.mxu0 0
      %1455 = vmatpush1.bf16.msra.mxu0 %v1443
      %1456 = vmatprep.subr.bf16.mxu0 0
      %1457 = vmatpush1.bf16.msra.mxu0 %v1444
      %1458 = vmatprep.subr.bf16.mxu0 0
      %1459 = vmatpush1.bf16.msra.mxu0 %v1445
      %1460 = vmatprep.subr.bf16.mxu0 0
      %1461 = vmatpush1.bf16.msra.mxu0 %v1446
      %1462 = vmatprep.subr.bf16.mxu0 0
      %1463 = vmatpush1.bf16.msra.mxu0 0
      %1464 = vmatprep.subr.bf16.mxu0 0
      %1465 = vmatpush1.bf16.msra.mxu0 0
      %1466 = vmatprep.subr.bf16.mxu0 0
      %1467 = vmatpush1.bf16.msra.mxu0 0
      %1468 = vmatprep.subr.bf16.mxu0 0
      %1469 = vmatpush1.bf16.msra.mxu0 0
      %1470 = vmatprep.subr.bf16.mxu0 0
      %1471 = vmatpush1.bf16.msra.mxu0 0
      %1472 = vmatprep.subr.bf16.mxu0 0
      %1473 = vmatpush1.bf16.msra.mxu0 0
      %1474 = vmatprep.subr.bf16.mxu0 0
      %1475 = vmatpush1.bf16.msra.mxu0 0
      %1476 = vmatprep.subr.bf16.mxu0 0
      %1477 = vmatpush1.bf16.msra.mxu0 0
      %1478 = vmatprep.subr.bf16.mxu0 0
      %1479 = vmatpush1.bf16.msra.mxu0 0
      %1480 = vmatprep.subr.bf16.mxu0 0
      %1481 = vmatpush1.bf16.msra.mxu0 0
      %1482 = vmatprep.subr.bf16.mxu0 0
      %1483 = vmatpush1.bf16.msra.mxu0 0
      %1484 = vmatprep.subr.bf16.mxu0 0
      %1485 = vmatpush1.bf16.msra.mxu0 0
      %1486 = vmatprep.mubr.bf16.mxu0 0
      %1487 = vmatmul.mubr.bf16.gmra.mrb[0].mxu0 %v1452
      %v1488 = vpop.f32.mrb[0].mxu0
      %v1489 = vadd.f32 0.0, %v1488
      %v1490 = vpop.f32.mrb[0].mxu0
      %v1491 = vpop.f32.mrb[0].mxu0
      %v1492 = vpop.f32.mrb[0].mxu0
      %1493 = vdwg.mxu0
      %v1494 = vld [vmem:[%s3] sm:$0xf]
      %v1495 = vld [vmem:[%s3 + $0x4] sm:$0xf]
      %v1496 = vpack.c.bf16 %v1413, %v1413
      %v1497 = vld [vmem:[%s4] sm:$0xf]
      %v1498 = vld [vmem:[%s4 + $0x4] sm:$0xf]
      %v1499 = vpack.c.bf16 %v1489, %v1489
      %v1502 = vunpack.c.l.b16 %v1497
      %v1503 = vunpack.c.l.b16 %v1498
      %v1504 = vpack.c.b16 %v1503, %v1502
      %v1506 = vsel %vm468, %v1504, 0
      %v1509 = vsel %vm890, %v1499, 0
      %1511 = vmatprep.subr.bf16.mxu0 0
      %1512 = vmatpush1.bf16.msra.mxu0 %v1509
      %1513 = vmatprep.subr.bf16.mxu0 0
      %1514 = vmatpush1.bf16.msra.mxu0 0
      %1515 = vmatprep.subr.bf16.mxu0 0
      %1516 = vmatpush1.bf16.msra.mxu0 0
      %1517 = vmatprep.subr.bf16.mxu0 0
      %1518 = vmatpush1.bf16.msra.mxu0 0
      %1519 = vmatprep.subr.bf16.mxu0 0
      %1520 = vmatpush1.bf16.msra.mxu0 0
      %1521 = vmatprep.subr.bf16.mxu0 0
      %1522 = vmatpush1.bf16.msra.mxu0 0
      %1523 = vmatprep.subr.bf16.mxu0 0
      %1524 = vmatpush1.bf16.msra.mxu0 0
      %1525 = vmatprep.subr.bf16.mxu0 0
      %1526 = vmatpush1.bf16.msra.mxu0 0
      %1527 = vmatprep.subr.bf16.mxu0 0
      %1528 = vmatpush1.bf16.msra.mxu0 0
      %1529 = vmatprep.subr.bf16.mxu0 0
      %1530 = vmatpush1.bf16.msra.mxu0 0
      %1531 = vmatprep.subr.bf16.mxu0 0
      %1532 = vmatpush1.bf16.msra.mxu0 0
      %1533 = vmatprep.subr.bf16.mxu0 0
      %1534 = vmatpush1.bf16.msra.mxu0 0
      %1535 = vmatprep.subr.bf16.mxu0 0
      %1536 = vmatpush1.bf16.msra.mxu0 0
      %1537 = vmatprep.subr.bf16.mxu0 0
      %1538 = vmatpush1.bf16.msra.mxu0 0
      %1539 = vmatprep.subr.bf16.mxu0 0
      %1540 = vmatpush1.bf16.msra.mxu0 0
      %1541 = vmatprep.subr.bf16.mxu0 0
      %1542 = vmatpush1.bf16.msra.mxu0 0
      %1543 = vmatprep.mubr.bf16.mxu0 0
      %1544 = vmatmul.mubr.bf16.gmra.mrb[0].mxu0 %v1506
      %v1545 = vpop.f32.mrb[0].mxu0
      %v1546 = vadd.f32 0.0, %v1545
      %v1547 = vpop.f32.mrb[0].mxu0
      %v1548 = vpop.f32.mrb[0].mxu0
      %v1549 = vadd.f32 0.0, %v1548
      %v1550 = vpop.f32.mrb[0].mxu0
      %1551 = vdwg.mxu0
      %v1554 = vunpack.c.l.b16 %v1494
      %v1555 = vunpack.c.l.b16 %v1495
      %v1556 = vpack.c.b16 %v1555, %v1554
      %v1558 = vsel %vm468, %v1556, 0
      %v1561 = vsel %vm890, %v1496, 0
      %1563 = vmatprep.subr.bf16.mxu0 0
      %1564 = vmatpush1.bf16.msra.mxu0 %v1561
      %1565 = vmatprep.subr.bf16.mxu0 0
      %1566 = vmatpush1.bf16.msra.mxu0 0
      %1567 = vmatprep.subr.bf16.mxu0 0
      %1568 = vmatpush1.bf16.msra.mxu0 0
      %1569 = vmatprep.subr.bf16.mxu0 0
      %1570 = vmatpush1.bf16.msra.mxu0 0
      %1571 = vmatprep.subr.bf16.mxu0 0
      %1572 = vmatpush1.bf16.msra.mxu0 0
      %1573 = vmatprep.subr.bf16.mxu0 0
      %1574 = vmatpush1.bf16.msra.mxu0 0
      %1575 = vmatprep.subr.bf16.mxu0 0
      %1576 = vmatpush1.bf16.msra.mxu0 0
      %1577 = vmatprep.subr.bf16.mxu0 0
      %1578 = vmatpush1.bf16.msra.mxu0 0
      %1579 = vmatprep.subr.bf16.mxu0 0
      %1580 = vmatpush1.bf16.msra.mxu0 0
      %1581 = vmatprep.subr.bf16.mxu0 0
      %1582 = vmatpush1.bf16.msra.mxu0 0
      %1583 = vmatprep.subr.bf16.mxu0 0
      %1584 = vmatpush1.bf16.msra.mxu0 0
      %1585 = vmatprep.subr.bf16.mxu0 0
      %1586 = vmatpush1.bf16.msra.mxu0 0
      %1587 = vmatprep.subr.bf16.mxu0 0
      %1588 = vmatpush1.bf16.msra.mxu0 0
      %1589 = vmatprep.subr.bf16.mxu0 0
      %1590 = vmatpush1.bf16.msra.mxu0 0
      %1591 = vmatprep.subr.bf16.mxu0 0
      %1592 = vmatpush1.bf16.msra.mxu0 0
      %1593 = vmatprep.subr.bf16.mxu0 0
      %1594 = vmatpush1.bf16.msra.mxu0 0
      %1595 = vmatprep.mubr.bf16.mxu0 0
      %1596 = vmatmul.mubr.bf16.gmra.mrb[0].mxu0 %v1558
      %v1597 = vpop.f32.mrb[0].mxu0
      %v1598 = vadd.f32 %v1546, %v1597
      %v1599 = vpop.f32.mrb[0].mxu0
      %v1600 = vpop.f32.mrb[0].mxu0
      %v1601 = vadd.f32 %v1549, %v1600
      %v1602 = vpop.f32.mrb[0].mxu0
      %1603 = vdwg.mxu0
      %v1604 = vld [vmem:[%s7] sm:$0x1]
      %v1606 = vlaneseq
      %v1607 = vshrl.u32 %v1606, 7
      %v1608 = vsub.s32 0, %v1607
      %v1609 = vrot.slane %v1604, %v1608
      %v1611 = vadd.f32 %v1598, %v1609
      %v1612 = vadd.f32 %v1601, %v1609
      %v1613 = vmax.f32 %v1611, 0.0
      %v1614 = vmax.f32 %v1612, 0.0
      %v1615 = vpack.c.bf16 %v1614, %v1613
      %v1616 = vld [vmem:[%s8] sm:$0xf]
      %v1617 = vld [vmem:[%s8 + $0x4] sm:$0xf]
      %v1618 = vld [vmem:[%s8 + $0x8] sm:$0xf]
      %v1619 = vld [vmem:[%s8 + $0xc] sm:$0xf]
      %v1620 = vld [vmem:[%s8 + $0x10] sm:$0xf]
      %v1621 = vld [vmem:[%s8 + $0x14] sm:$0xf]
      %v1622 = vld [vmem:[%s8 + $0x18] sm:$0xf]
      %v1623 = vld [vmem:[%s8 + $0x1c] sm:$0xf]
      %v1624 = vld [vmem:[%s9] sm:$0x1]
      %v1626 = vlaneseq
      %v1627 = vshrl.u32 %v1626, 7
      %v1628 = vsub.s32 0, %v1627
      %v1629 = vrot.slane %v1624, %v1628
      %v1639 = vunpack.c.l.b16 %v1616
      %v1640 = vunpack.c.l.b16 %v1617
      %v1641 = vunpack.c.l.b16 %v1618
      %v1642 = vunpack.c.l.b16 %v1619
      %v1643 = vunpack.c.l.b16 %v1620
      %v1644 = vunpack.c.l.b16 %v1621
      %v1645 = vunpack.c.l.b16 %v1622
      %v1646 = vunpack.c.l.b16 %v1623
      %v1647 = vpack.c.b16 %v1640, %v1639
      %v1648 = vpack.c.b16 %v1642, %v1641
      %v1649 = vpack.c.b16 %v1644, %v1643
      %v1650 = vpack.c.b16 %v1646, %v1645
      %v1656 = vsel %vm790, %v1615, 0
      %1658 = vmatprep.subr.bf16.mxu0 0
      %1659 = vmatpush1.bf16.msra.mxu0 %v1647
      %1660 = vmatprep.subr.bf16.mxu0 0
      %1661 = vmatpush1.bf16.msra.mxu0 %v1648
      %1662 = vmatprep.subr.bf16.mxu0 0
      %1663 = vmatpush1.bf16.msra.mxu0 %v1649
      %1664 = vmatprep.subr.bf16.mxu0 0
      %1665 = vmatpush1.bf16.msra.mxu0 %v1650
      %1666 = vmatprep.subr.bf16.mxu0 0
      %1667 = vmatpush1.bf16.msra.mxu0 0
      %1668 = vmatprep.subr.bf16.mxu0 0
      %1669 = vmatpush1.bf16.msra.mxu0 0
      %1670 = vmatprep.subr.bf16.mxu0 0
      %1671 = vmatpush1.bf16.msra.mxu0 0
      %1672 = vmatprep.subr.bf16.mxu0 0
      %1673 = vmatpush1.bf16.msra.mxu0 0
      %1674 = vmatprep.subr.bf16.mxu0 0
      %1675 = vmatpush1.bf16.msra.mxu0 0
      %1676 = vmatprep.subr.bf16.mxu0 0
      %1677 = vmatpush1.bf16.msra.mxu0 0
      %1678 = vmatprep.subr.bf16.mxu0 0
      %1679 = vmatpush1.bf16.msra.mxu0 0
      %1680 = vmatprep.subr.bf16.mxu0 0
      %1681 = vmatpush1.bf16.msra.mxu0 0
      %1682 = vmatprep.subr.bf16.mxu0 0
      %1683 = vmatpush1.bf16.msra.mxu0 0
      %1684 = vmatprep.subr.bf16.mxu0 0
      %1685 = vmatpush1.bf16.msra.mxu0 0
      %1686 = vmatprep.subr.bf16.mxu0 0
      %1687 = vmatpush1.bf16.msra.mxu0 0
      %1688 = vmatprep.subr.bf16.mxu0 0
      %1689 = vmatpush1.bf16.msra.mxu0 0
      %1690 = vmatprep.mubr.bf16.mxu0 0
      %1691 = vmatmul.mubr.bf16.gmra.mrb[0].mxu0 %v1656
      %v1692 = vpop.f32.mrb[0].mxu0
      %v1693 = vadd.f32 %v1629, %v1692
      %v1694 = vpop.f32.mrb[0].mxu0
      %v1695 = vpop.f32.mrb[0].mxu0
      %v1696 = vadd.f32 %v1629, %v1695
      %v1697 = vpop.f32.mrb[0].mxu0
      %1698 = vdwg.mxu0
      %v1699 = vmax.f32 %v1693, 0.0
      %v1700 = vmax.f32 %v1696, 0.0
      %v1701 = vpack.c.bf16 %v1700, %v1699
      %v1702 = vld [vmem:[%s10] sm:$0xf]
      %v1703 = vld [vmem:[%s10 + $0x4] sm:$0xf]
      %v1704 = vld [vmem:[%s10 + $0x8] sm:$0xf]
      %v1705 = vld [vmem:[%s10 + $0xc] sm:$0xf]
      %v1706 = vld [vmem:[%s10 + $0x10] sm:$0xf]
      %v1707 = vld [vmem:[%s10 + $0x14] sm:$0xf]
      %v1708 = vld [vmem:[%s10 + $0x18] sm:$0xf]
      %v1709 = vld [vmem:[%s10 + $0x1c] sm:$0xf]
      %v1710 = vld [vmem:[%s11] sm:$0x1]
      %v1712 = vlaneseq
      %v1713 = vshrl.u32 %v1712, 7
      %v1714 = vsub.s32 0, %v1713
      %v1715 = vrot.slane %v1710, %v1714
      %v1725 = vunpack.c.l.b16 %v1702
      %v1726 = vunpack.c.l.b16 %v1703
      %v1727 = vunpack.c.l.b16 %v1704
      %v1728 = vunpack.c.l.b16 %v1705
      %v1729 = vunpack.c.l.b16 %v1706
      %v1730 = vunpack.c.l.b16 %v1707
      %v1731 = vunpack.c.l.b16 %v1708
      %v1732 = vunpack.c.l.b16 %v1709
      %v1733 = vpack.c.b16 %v1726, %v1725
      %v1734 = vpack.c.b16 %v1728, %v1727
      %v1735 = vpack.c.b16 %v1730, %v1729
      %v1736 = vpack.c.b16 %v1732, %v1731
      %v1742 = vsel %vm790, %v1701, 0
      %1744 = vmatprep.subr.bf16.mxu0 0
      %1745 = vmatpush1.bf16.msra.mxu0 %v1733
      %1746 = vmatprep.subr.bf16.mxu0 0
      %1747 = vmatpush1.bf16.msra.mxu0 %v1734
      %1748 = vmatprep.subr.bf16.mxu0 0
      %1749 = vmatpush1.bf16.msra.mxu0 %v1735
      %1750 = vmatprep.subr.bf16.mxu0 0
      %1751 = vmatpush1.bf16.msra.mxu0 %v1736
      %1752 = vmatprep.subr.bf16.mxu0 0
      %1753 = vmatpush1.bf16.msra.mxu0 0
      %1754 = vmatprep.subr.bf16.mxu0 0
      %1755 = vmatpush1.bf16.msra.mxu0 0
      %1756 = vmatprep.subr.bf16.mxu0 0
      %1757 = vmatpush1.bf16.msra.mxu0 0
      %1758 = vmatprep.subr.bf16.mxu0 0
      %1759 = vmatpush1.bf16.msra.mxu0 0
      %1760 = vmatprep.subr.bf16.mxu0 0
      %1761 = vmatpush1.bf16.msra.mxu0 0
      %1762 = vmatprep.subr.bf16.mxu0 0
      %1763 = vmatpush1.bf16.msra.mxu0 0
      %1764 = vmatprep.subr.bf16.mxu0 0
      %1765 = vmatpush1.bf16.msra.mxu0 0
      %1766 = vmatprep.subr.bf16.mxu0 0
      %1767 = vmatpush1.bf16.msra.mxu0 0
      %1768 = vmatprep.subr.bf16.mxu0 0
      %1769 = vmatpush1.bf16.msra.mxu0 0
      %1770 = vmatprep.subr.bf16.mxu0 0
      %1771 = vmatpush1.bf16.msra.mxu0 0
      %1772 = vmatprep.subr.bf16.mxu0 0
      %1773 = vmatpush1.bf16.msra.mxu0 0
      %1774 = vmatprep.subr.bf16.mxu0 0
      %1775 = vmatpush1.bf16.msra.mxu0 0
      %1776 = vmatprep.mubr.bf16.mxu0 0
      %1777 = vmatmul.mubr.bf16.gmra.mrb[0].mxu0 %v1742
      %v1778 = vpop.f32.mrb[0].mxu0
      %v1779 = vadd.f32 %v1715, %v1778
      %v1780 = vpop.f32.mrb[0].mxu0
      %v1781 = vpop.f32.mrb[0].mxu0
      %v1782 = vadd.f32 %v1715, %v1781
      %v1783 = vpop.f32.mrb[0].mxu0
      %1784 = vdwg.mxu0
      %1785 = vst [vmem:[%s433] sm:$0xff] %v1779
      %1786 = vst [vmem:[%s433 + $0x8] sm:$0xff] %v1782
      %p1787 = scmp.lt.s32.totalorder %s23, 1
      %s1788 = scalar_select %p1787, %s23, 1
      %s1789 = smul.addr %s1788, 2
      %s1790 = smul.addr %s1789, 8
      %s1791 = scalar_lea.vmem %s12, %s1790
      // Predicated region
      $region69: #{_lambda_.1} parent=67 // pred_check
        %p1792 = pneg %p303
      $region70: #{_lambda_.1} parent=67 // pred_check_branch
        %1794 = sbr.rel (%p1792) target = $region72
      $region71: #{_lambda_.1} parent=67 // pred_region
        _
      $region72: #{_lambda_.1} parent=67 // pred_fallthru
        _
    $region68: #{_lambda_.1} parent=5 // pred_fallthru
      _
    %p1795 = scmp.le.s32.totalorder 2, %s18
    // Predicated region
    $region73: #{_lambda_.1} parent=5 // pred_check
      %p1796 = pneg %p1795
    $region74: #{_lambda_.1} parent=5 // pred_check_branch
      %1798 = sbr.rel (%p1796) target = $region76
    $region75: #{_lambda_.1} parent=5 // pred_region
      %s1799 = ssub.s32 %s18, 2
      // Predicated region
      $region77: #{_lambda_.1} parent=75 // pred_check
        %p1800 = pneg %p309
      $region78: #{_lambda_.1} parent=75 // pred_check_branch
        %1802 = sbr.rel (%p1800) target = $region80
      $region79: #{_lambda_.1} parent=75 // pred_region
        %p1803 = scmp.lt.s32.totalorder %s24, 1
        %s1804 = scalar_select %p1803, %s24, 1
        %s1805 = smul.addr %s1804, 2
        %s1806 = smul.addr %s1805, 8
        %s1807 = scalar_lea.vmem %s12, %s1806
      $region80: #{_lambda_.1} parent=75 // pred_fallthru
        _
    $region76: #{_lambda_.1} parent=5 // pred_fallthru
      _
  $region6: #{_lambda_.1} parent=0 // loop_footer
    %s22 = sadd.s32 1, %s18
  $region7: #{_lambda_.1} parent=0 // loop_footer_branch
    %17 = sbr.rel target = $region3
  $region8: #{_lambda_.1} parent=0 // loop_exit
    _

</llo_original>
